<compile_context>
chip_gen: v7x
topology: tpu7x:2x2x1
jax: 0.10.0
libtpu: 0.0.40
codegen_flags: <defaults>
</compile_context>

<pallas_src>
import functools

import jax
import jax.numpy as jnp
from jax.experimental import pallas as pl
from jax.experimental.pallas import tpu as pltpu


# ----------------------------------------------------------------------------
# Pallas kernel: whole Wavenet forward for one (mu, BB*Tp) lane slab per step.
# ----------------------------------------------------------------------------
def wavenet_kernel(dilations, t_valid, t_pad,
                   x_ref,                 # (mu, N)  bf16,  N = BB*Tp
                   wc_ref, bc_ref,        # (R, mu) bf16, (R, 1) f32
                   wtg_ref, btg_ref,      # (D, 2R, 3R) bf16, (D, 2R, 1) f32
                   wres_ref, bres_ref,    # (D, R, R) bf16, (D, R, 1) f32
                   wskip_ref, bskip_ref,  # (S, D*R) bf16, (S, 1) f32
                   w1_ref, b1_ref,        # (H, S) bf16, (H, 1) f32
                   w2_ref, b2_ref,        # (mu, H) bf16, (mu, 1) f32
                   out_ref,               # (mu, N)  f32
                   gated_ref):            # (D*R, N) f32 scratch
    f32, bf16 = jnp.float32, jnp.bfloat16
    R = wc_ref.shape[0]

    x = x_ref[...]                               # (mu, N) bf16
    n = x.shape[1]

    # Per-lane time index WITHIN a sequence (batch elements are concatenated
    # along the lane axis in chunks of t_pad columns).
    lane = jax.lax.broadcasted_iota(jnp.int32, (R, n), 1)
    t_idx = lane if n == t_pad else lane % t_pad

    # 1x1 "causal" conv + ReLU (bf16 MXU operands, f32 accumulate).
    res = jnp.maximum(
        jnp.dot(wc_ref[...], x, preferred_element_type=f32) + bc_ref[...], 0.0)
    if t_valid != t_pad:
        # make the padded time columns numerically inert
        res = jnp.where(t_idx < t_valid, res, 0.0)

    # TODO(synk): for deep stacks (repeat > 1), wrap the repeat dimension in
    # lax.fori_loop with dynamic weight indexing to keep code size O(cycle).
    for i, d in enumerate(dilations):
        # Taps on the CONTRACTION axis: xin = [x[t-d]; x[t]; x[t+d]]  (3R, N).
        # Shifted taps are lane rotations of `res` (XLU) with wrapped /
        # out-of-range columns zeroed ('same' zero padding; also prevents
        # cross-sequence leakage since batch shares the lane axis).
        prev = jnp.where(t_idx >= d, pltpu.roll(res, shift=d, axis=1), 0.0)
        nxt = jnp.where(t_idx < t_valid - d,
                        pltpu.roll(res, shift=n - d, axis=1), 0.0)
        xin = jnp.concatenate([prev, res, nxt], axis=0).astype(bf16)

        # One (2R, 3R) @ (3R, N) matmul covers both tanh and sigmoid branches.
        pre = jnp.dot(wtg_ref[i], xin, preferred_element_type=f32) + btg_ref[i]
        gated = jnp.tanh(pre[0:R]) * jax.nn.sigmoid(pre[R:2 * R])  # (R, N) f32

        # Park gated activations for the deferred skip projection.
        # (f32 scratch keeps the R-row stores sublane-aligned for any R >= 8;
        #  TODO(synk): switch to a bf16 scratch when R is a multiple of 16.)
        gated_ref[i * R:(i + 1) * R, :] = gated

        # Residual path (sequential dependence -> stays in the loop).
        res = jnp.dot(wres_ref[i], gated.astype(bf16),
                      preferred_element_type=f32) + bres_ref[i] + res

    # Deferred skip projection: ONE (S, D*R) @ (D*R, N) matmul replaces the D
    # per-layer K=R skip matmuls and the D f32 (S, N) accumulator adds.
    skip = jnp.dot(wskip_ref[...], gated_ref[...].astype(bf16),
                   preferred_element_type=f32) + bskip_ref[...]

    # Output head: ReLU -> 1x1 conv -> ReLU -> 1x1 conv.
    h = jnp.maximum(skip, 0.0)
    h = jnp.maximum(
        jnp.dot(w1_ref[...], h.astype(bf16), preferred_element_type=f32)
        + b1_ref[...], 0.0)
    out = jnp.dot(w2_ref[...], h.astype(bf16), preferred_element_type=f32) \
        + b2_ref[...]
    out_ref[...] = out.astype(out_ref.dtype)


# ----------------------------------------------------------------------------
# Parameter fusion (PyTorch Conv1d shapes -> kernel layout)
# ----------------------------------------------------------------------------
def prepare_params(params):
    (wc, bc, wt, bt, wg, bg, wskip, bskip, wres, bres, w1, b1, w2, b2) = params
    bf16, f32 = jnp.bfloat16, jnp.float32
    D, R = wt.shape[0], wt.shape[1]
    S = wskip.shape[1]
    # Dilated-conv taps fused on the contraction axis: (D, 2R, 3R).
    wt_k = jnp.concatenate([wt[..., 0], wt[..., 1], wt[..., 2]], axis=2)
    wg_k = jnp.concatenate([wg[..., 0], wg[..., 1], wg[..., 2]], axis=2)
    wtg = jnp.concatenate([wt_k, wg_k], axis=1)                  # (D, 2R, 3R)
    btg = jnp.concatenate([bt, bg], axis=1)[..., None]           # (D, 2R, 1)
    # Deferred skip projection: one (S, D*R) weight, biases summed over layers.
    wskip_all = jnp.transpose(wskip, (1, 0, 2)).reshape(S, D * R)
    bskip_sum = jnp.sum(bskip, axis=0)[:, None]                  # (S, 1)
    return (wc.astype(bf16), bc[:, None].astype(f32),
            wtg.astype(bf16), btg.astype(f32),
            wres.astype(bf16), bres[..., None].astype(f32),
            wskip_all.astype(bf16), bskip_sum.astype(f32),
            w1.astype(bf16), b1[:, None].astype(f32),
            w2.astype(bf16), b2[:, None].astype(f32))


# ----------------------------------------------------------------------------
# Wrapper
# ----------------------------------------------------------------------------
def wavenet_forward(x_ncw, params, dilations):
    """x_ncw: (B, mu, T) like the PyTorch module. Returns (B, mu, T) f32."""
    B, mu, T = x_ncw.shape
    assert max(dilations) < T, "dilation must be smaller than sequence length"
    D = len(dilations)
    R = params[0].shape[0]          # wc: (R, mu)
    S = params[6].shape[1]          # wskip: (D, S, R)
    H = params[10].shape[0]         # w1: (H, S)

    # Time on lanes, padded to a 128 multiple; batch folded onto the lane axis
    # in groups of `bb` sequences so each matmul sees N = bb*Tp lanes.
    Tp = ((T + 127) // 128) * 128
    bb = max(1, min(B, max(1, 512 // Tp)))       # target >= 512-lane matmul N
    while B % bb:
        bb -= 1
    G = B // bb
    N = bb * Tp

    # One fused XLA transpose+pad+reshape: (B, mu, T) -> (mu, B*Tp) bf16.
    # TODO(synk): for long sequences, tile the grid over time instead (halo of
    # sum(dilations) columns per side) so per-step VMEM stops scaling with T.
    xl = jnp.transpose(x_ncw, (1, 0, 2)).astype(jnp.bfloat16)
    xl = jnp.pad(xl, ((0, 0), (0, 0), (0, Tp - T))).reshape(mu, B * Tp)

    prep = prepare_params(params)

    def wspec():
        # Constant across the grid -> single resident VMEM copy,
        # no per-step double buffering.
        return pl.BlockSpec(memory_space=pltpu.MemorySpace.VMEM)

    in_specs = [pl.BlockSpec((mu, N), lambda g: (0, g))]
    in_specs += [wspec() for _ in prep]
    out_spec = pl.BlockSpec((mu, N), lambda g: (0, g))

    # Advisory cost estimate (valid elements only, not padded).
    flops = 2 * B * T * (mu * R + D * (6 * R * R + R * R)
                         + S * D * R + H * S + mu * H)
    transcendentals = 2 * B * T * R * D
    weight_bytes = sum(int(p.size) * p.dtype.itemsize for p in prep)
    bytes_accessed = int(xl.size) * 2 + B * mu * Tp * 4 + weight_bytes

    # VMEM budget: generous but clamped to the chip's real capacity
    # (v7x: 64 MiB / TensorCore; v5e/v6e: 128 MiB) minus headroom.
    block_bytes = mu * N * (2 + 4)                   # bf16 in + f32 out tile
    live_rows = 3 * R + 2 * R + 2 * R + D * R + S + H + mu
    need = weight_bytes + 2 * block_bytes + live_rows * N * 4 + (1 << 20)
    try:
        chip_vmem = int(pltpu.get_tpu_info().vmem_capacity_bytes)
    except Exception:
        chip_vmem = 64 * 1024 * 1024                 # safe on every generation
    vmem_limit = min(chip_vmem - 4 * 1024 * 1024,
                     max(32 * 1024 * 1024, 2 * need))
    vmem_limit = max(vmem_limit, 4 * 1024 * 1024)

    out = pl.pallas_call(
        functools.partial(wavenet_kernel, tuple(dilations), T, Tp),
        grid=(G,),
        in_specs=in_specs,
        out_specs=out_spec,
        out_shape=jax.ShapeDtypeStruct((mu, B * Tp), jnp.float32),
        scratch_shapes=[pltpu.VMEM((D * R, N), jnp.float32)],
        compiler_params=pltpu.CompilerParams(
            dimension_semantics=("parallel",),
            vmem_limit_bytes=int(vmem_limit)),
        cost_estimate=pl.CostEstimate(
            flops=int(flops), transcendentals=int(transcendentals),
            bytes_accessed=int(bytes_accessed)),
    )(xl, *prep)

    out = out.reshape(mu, B, Tp)[:, :, :T]           # drop time padding
    return jnp.transpose(out, (1, 0, 2))             # back to (B, mu, T)


# ----------------------------------------------------------------------------
# Pure-JAX reference (explicit padding, separate matmuls) for correctness.
# Uses the same bf16-operand / f32-accumulate matmul convention as the kernel.
# ----------------------------------------------------------------------------
def wavenet_ref(x_ncw, params, dilations):
    (wc, bc, wt, bt, wg, bg, wskip, bskip, wres, bres, w1, b1, w2, b2) = params
    bf16, f32 = jnp.bfloat16, jnp.float32

    def mm(w, a):
        return jnp.dot(w.astype(bf16), a.astype(bf16),
                       preferred_element_type=f32)

    x = x_ncw.astype(f32)
    B, mu, T = x.shape
    outs = []
    for b in range(B):
        xb = x[b]                                           # (mu, T)
        res = jax.nn.relu(mm(wc, xb) + bc[:, None])
        skip_sum = 0.0
        for i, d in enumerate(dilations):
            xp = jnp.pad(res, ((0, 0), (d, d)))
            taps = [xp[:, k * d:k * d + T] for k in range(3)]
            pre_t = sum(mm(wt[i, :, :, k], taps[k]) for k in range(3)) \
                + bt[i][:, None]
            pre_g = sum(mm(wg[i, :, :, k], taps[k]) for k in range(3)) \
                + bg[i][:, None]
            gated = jnp.tanh(pre_t) * jax.nn.sigmoid(pre_g)
            skip_sum = skip_sum + mm(wskip[i], gated) + bskip[i][:, None]
            res = mm(wres[i], gated) + bres[i][:, None] + res
        h = jax.nn.relu(skip_sum)
        h = jax.nn.relu(mm(w1, h) + b1[:, None])
        outs.append(mm(w2, h) + b2[:, None])
    return jnp.stack(outs)


# ----------------------------------------------------------------------------
# Deterministic parameter init (PyTorch Conv1d-like shapes, synthetic)
# ----------------------------------------------------------------------------
def init_params(key, mu, n_residue, n_skip, dilations):
    D = len(dilations)
    H = mu // 2
    ks = jax.random.split(key, 14)
    s = 0.1
    wc    = s * jax.random.normal(ks[0],  (n_residue, mu), jnp.float32)
    bc    = s * jax.random.normal(ks[1],  (n_residue,), jnp.float32)
    wt    = s * jax.random.normal(ks[2],  (D, n_residue, n_residue, 3), jnp.float32)
    bt    = s * jax.random.normal(ks[3],  (D, n_residue), jnp.float32)
    wg    = s * jax.random.normal(ks[4],  (D, n_residue, n_residue, 3), jnp.float32)
    bg    = s * jax.random.normal(ks[5],  (D, n_residue), jnp.float32)
    wskip = s * jax.random.normal(ks[6],  (D, n_skip, n_residue), jnp.float32)
    bskip = s * jax.random.normal(ks[7],  (D, n_skip), jnp.float32)
    wres  = s * jax.random.normal(ks[8],  (D, n_residue, n_residue), jnp.float32)
    bres  = s * jax.random.normal(ks[9],  (D, n_residue), jnp.float32)
    w1    = s * jax.random.normal(ks[10], (H, n_skip), jnp.float32)
    b1    = s * jax.random.normal(ks[11], (H,), jnp.float32)
    w2    = s * jax.random.normal(ks[12], (mu, H), jnp.float32)
    b2    = s * jax.random.normal(ks[13], (mu,), jnp.float32)
    return (wc, bc, wt, bt, wg, bg, wskip, bskip, wres, bres, w1, b1, w2, b2)


if __name__ == "__main__":
    # Small config consistent with Wavenet(mu=16, n_residue=8, n_skip=16,
    #                                      dilations=4, repeat=1)
    mu, n_residue, n_skip = 16, 8, 16
    n_dilations, repeat = 4, 1
    dilations = [2 ** i for i in range(n_dilations)] * repeat   # [1, 2, 4, 8]

    B, T = 2, 16
    key = jax.random.PRNGKey(0)
    kx, kp = jax.random.split(key)
    x = jax.random.normal(kx, (B, mu, T), jnp.float32)          # NCW like PyTorch
    params = init_params(kp, mu, n_residue, n_skip, dilations)

    out = jax.block_until_ready(wavenet_forward(x, params, dilations))
    ref = jax.block_until_ready(wavenet_ref(x, params, dilations))

    assert out.shape == (B, mu, T)
    err = float(jnp.max(jnp.abs(out - ref)))
    assert jnp.allclose(out, ref, rtol=1e-2, atol=1e-2), f"max abs err {err}"

    print("KERNEL_OK")
</pallas_src>

<mosaic_0001>
module attributes {stable_mosaic.version = 11 : i64} {
  func.func @wavenet_kernel(%arg0: i32, %arg1: memref<16x256xbf16, #tpu.memory_space<vmem>>, %arg2: memref<8x16xbf16, #tpu.memory_space<vmem>>, %arg3: memref<8x1xf32, #tpu.memory_space<vmem>>, %arg4: memref<4x16x24xbf16, #tpu.memory_space<vmem>>, %arg5: memref<4x16x1xf32, #tpu.memory_space<vmem>>, %arg6: memref<4x8x8xbf16, #tpu.memory_space<vmem>>, %arg7: memref<4x8x1xf32, #tpu.memory_space<vmem>>, %arg8: memref<16x32xbf16, #tpu.memory_space<vmem>>, %arg9: memref<16x1xf32, #tpu.memory_space<vmem>>, %arg10: memref<8x16xbf16, #tpu.memory_space<vmem>>, %arg11: memref<8x1xf32, #tpu.memory_space<vmem>>, %arg12: memref<16x8xbf16, #tpu.memory_space<vmem>>, %arg13: memref<16x1xf32, #tpu.memory_space<vmem>>, %arg14: memref<16x256xf32, #tpu.memory_space<vmem>>, %arg15: memref<32x256xf32, #tpu.memory_space<vmem>>) attributes {dimension_semantics = [#tpu.dimension_semantics<parallel>], iteration_bounds = array<i64: 1>, scalar_prefetch = 0 : i64, scratch_operands = 1 : i64, tpu.core_type = #tpu.core_type<tc>, window_params = [{transform_indices = @transform_0, window_bounds = array<i64: 16, 256>}, {pipeline_mode = #tpu.pipeline_mode<synchronous>, transform_indices = @transform_1, window_bounds = array<i64: 8, 16>}, {pipeline_mode = #tpu.pipeline_mode<synchronous>, transform_indices = @transform_2, window_bounds = array<i64: 8, 1>}, {pipeline_mode = #tpu.pipeline_mode<synchronous>, transform_indices = @transform_3, window_bounds = array<i64: 4, 16, 24>}, {pipeline_mode = #tpu.pipeline_mode<synchronous>, transform_indices = @transform_4, window_bounds = array<i64: 4, 16, 1>}, {pipeline_mode = #tpu.pipeline_mode<synchronous>, transform_indices = @transform_5, window_bounds = array<i64: 4, 8, 8>}, {pipeline_mode = #tpu.pipeline_mode<synchronous>, transform_indices = @transform_6, window_bounds = array<i64: 4, 8, 1>}, {pipeline_mode = #tpu.pipeline_mode<synchronous>, transform_indices = @transform_7, window_bounds = array<i64: 16, 32>}, {pipeline_mode = #tpu.pipeline_mode<synchronous>, transform_indices = @transform_8, window_bounds = array<i64: 16, 1>}, {pipeline_mode = #tpu.pipeline_mode<synchronous>, transform_indices = @transform_9, window_bounds = array<i64: 8, 16>}, {pipeline_mode = #tpu.pipeline_mode<synchronous>, transform_indices = @transform_10, window_bounds = array<i64: 8, 1>}, {pipeline_mode = #tpu.pipeline_mode<synchronous>, transform_indices = @transform_11, window_bounds = array<i64: 16, 8>}, {pipeline_mode = #tpu.pipeline_mode<synchronous>, transform_indices = @transform_12, window_bounds = array<i64: 16, 1>}, {transform_indices = @transform_13, window_bounds = array<i64: 16, 256>}]} {
    %c0 = arith.constant 0 : index
    %c0_0 = arith.constant 0 : index
    %0 = vector.load %arg1[%c0, %c0_0] : memref<16x256xbf16, #tpu.memory_space<vmem>>, vector<16x256xbf16>
    %1 = tpu.iota {dimensions = array<i32: 1>} : vector<8x256xi32>
    %c128_i32 = arith.constant 128 : i32
    %c0_i32 = arith.constant 0 : i32
    %2 = arith.cmpi eq, %c128_i32, %c0_i32 : i32
    %c1_i32 = arith.constant 1 : i32
    %3 = arith.select %2, %c1_i32, %c128_i32 : i32
    %4 = vector.broadcast %3 : i32 to vector<8x256xi32>
    %5 = arith.remsi %1, %4 : vector<8x256xi32>
    %c0_i32_1 = arith.constant 0 : i32
    %6 = vector.broadcast %c0_i32_1 : i32 to vector<8x256xi32>
    %7 = arith.cmpi ne, %5, %6 : vector<8x256xi32>
    %c0_i32_2 = arith.constant 0 : i32
    %8 = vector.broadcast %c0_i32_2 : i32 to vector<8x256xi32>
    %9 = arith.cmpi slt, %5, %8 : vector<8x256xi32>
    %c0_i32_3 = arith.constant 0 : i32
    %10 = arith.cmpi slt, %3, %c0_i32_3 : i32
    %11 = vector.broadcast %10 : i1 to vector<8x256xi1>
    %12 = vector.broadcast %11 : vector<8x256xi1> to vector<8x256xi1>
    %13 = arith.xori %9, %12 : vector<8x256xi1>
    %14 = arith.andi %13, %7 : vector<8x256xi1>
    %15 = vector.broadcast %3 : i32 to vector<8x256xi32>
    %16 = arith.addi %5, %15 : vector<8x256xi32>
    %17 = arith.select %14, %16, %5 : vector<8x256xi1>, vector<8x256xi32>
    %c0_4 = arith.constant 0 : index
    %c0_5 = arith.constant 0 : index
    %18 = vector.load %arg2[%c0_4, %c0_5] : memref<8x16xbf16, #tpu.memory_space<vmem>>, vector<8x16xbf16>
    %cst = arith.constant dense<0.000000e+00> : vector<8x256xf32>
    %19 = tpu.matmul %18, %0, %cst {dimension_numbers = #tpu.dot_dimension_numbers<[1], [0], [0], [1], [0, 0, 1, 1], [], []>} : vector<8x16xbf16>, vector<16x256xbf16>, vector<8x256xf32> -> vector<8x256xf32>
    %c0_6 = arith.constant 0 : index
    %c0_7 = arith.constant 0 : index
    %20 = vector.load %arg3[%c0_6, %c0_7] : memref<8x1xf32, #tpu.memory_space<vmem>>, vector<8x1xf32>
    %21 = vector.broadcast %20 : vector<8x1xf32> to vector<8x256xf32>
    %22 = arith.addf %19, %21 : vector<8x256xf32>
    %cst_8 = arith.constant 0.000000e+00 : f32
    %23 = vector.broadcast %cst_8 : f32 to vector<8x256xf32>
    %24 = arith.maximumf %22, %23 : vector<8x256xf32>
    %c16_i32 = arith.constant 16 : i32
    %25 = vector.broadcast %c16_i32 : i32 to vector<8x256xi32>
    %26 = arith.cmpi slt, %17, %25 : vector<8x256xi32>
    %cst_9 = arith.constant 0.000000e+00 : f32
    %27 = vector.broadcast %cst_9 : f32 to vector<8x256xf32>
    %28 = arith.select %26, %24, %27 : vector<8x256xi1>, vector<8x256xf32>
    %c1_i32_10 = arith.constant 1 : i32
    %29 = vector.broadcast %c1_i32_10 : i32 to vector<8x256xi32>
    %30 = arith.cmpi sge, %17, %29 : vector<8x256xi32>
    %c1_i32_11 = arith.constant 1 : i32
    %31 = tpu.dynamic_rotate %28 by %c1_i32_11 dim 1 : vector<8x256xf32>, i32 -> vector<8x256xf32>
    %cst_12 = arith.constant 0.000000e+00 : f32
    %32 = vector.broadcast %cst_12 : f32 to vector<8x256xf32>
    %33 = arith.select %30, %31, %32 : vector<8x256xi1>, vector<8x256xf32>
    %c15_i32 = arith.constant 15 : i32
    %34 = vector.broadcast %c15_i32 : i32 to vector<8x256xi32>
    %35 = arith.cmpi slt, %17, %34 : vector<8x256xi32>
    %c255_i32 = arith.constant 255 : i32
    %36 = tpu.dynamic_rotate %28 by %c255_i32 dim 1 : vector<8x256xf32>, i32 -> vector<8x256xf32>
    %cst_13 = arith.constant 0.000000e+00 : f32
    %37 = vector.broadcast %cst_13 : f32 to vector<8x256xf32>
    %38 = arith.select %35, %36, %37 : vector<8x256xi1>, vector<8x256xf32>
    %39 = tpu.concatenate %33, %28, %38 in 0 : vector<8x256xf32>, vector<8x256xf32>, vector<8x256xf32> -> vector<24x256xf32>
    %40 = arith.truncf %39 : vector<24x256xf32> to vector<24x256xbf16>
    %c0_14 = arith.constant 0 : index
    %c0_15 = arith.constant 0 : index
    %c0_16 = arith.constant 0 : index
    %41 = vector.load %arg4[%c0_14, %c0_15, %c0_16] : memref<4x16x24xbf16, #tpu.memory_space<vmem>>, vector<1x16x24xbf16>
    %42 = vector.shape_cast %41 : vector<1x16x24xbf16> to vector<16x24xbf16>
    %cst_17 = arith.constant dense<0.000000e+00> : vector<16x256xf32>
    %43 = tpu.matmul %42, %40, %cst_17 {dimension_numbers = #tpu.dot_dimension_numbers<[1], [0], [0], [1], [0, 0, 1, 1], [], []>} : vector<16x24xbf16>, vector<24x256xbf16>, vector<16x256xf32> -> vector<16x256xf32>
    %c0_18 = arith.constant 0 : index
    %c0_19 = arith.constant 0 : index
    %c0_20 = arith.constant 0 : index
    %44 = vector.load %arg5[%c0_18, %c0_19, %c0_20] : memref<4x16x1xf32, #tpu.memory_space<vmem>>, vector<1x16x1xf32>
    %45 = vector.shape_cast %44 : vector<1x16x1xf32> to vector<16x1xf32>
    %46 = vector.broadcast %45 : vector<16x1xf32> to vector<16x256xf32>
    %47 = arith.addf %43, %46 : vector<16x256xf32>
    %48 = vector.extract_strided_slice %47 {offsets = [0, 0], sizes = [8, 256], strides = [1, 1]} : vector<16x256xf32> to vector<8x256xf32>
    %49 = math.tanh %48 : vector<8x256xf32>
    %50 = vector.extract_strided_slice %47 {offsets = [8, 0], sizes = [8, 256], strides = [1, 1]} : vector<16x256xf32> to vector<8x256xf32>
    %51 = arith.negf %50 : vector<8x256xf32>
    %52 = math.exp %51 : vector<8x256xf32>
    %cst_21 = arith.constant 1.000000e+00 : f32
    %53 = vector.broadcast %cst_21 : f32 to vector<8x256xf32>
    %54 = arith.addf %53, %52 : vector<8x256xf32>
    %55 = arith.divf %53, %54 : vector<8x256xf32>
    %56 = arith.mulf %49, %55 : vector<8x256xf32>
    %c0_22 = arith.constant 0 : index
    %c0_23 = arith.constant 0 : index
    %57 = vector.load %arg15[%c0_22, %c0_23] : memref<32x256xf32, #tpu.memory_space<vmem>>, vector<8x256xf32>
    tpu.vector_store %arg15[%c0_22, %c0_23], %56 {strides = array<i32>} : memref<32x256xf32, #tpu.memory_space<vmem>>, vector<8x256xf32>,
    %c0_24 = arith.constant 0 : index
    %c0_25 = arith.constant 0 : index
    %c0_26 = arith.constant 0 : index
    %58 = vector.load %arg6[%c0_24, %c0_25, %c0_26] : memref<4x8x8xbf16, #tpu.memory_space<vmem>>, vector<1x8x8xbf16>
    %59 = vector.shape_cast %58 : vector<1x8x8xbf16> to vector<8x8xbf16>
    %60 = arith.truncf %56 : vector<8x256xf32> to vector<8x256xbf16>
    %cst_27 = arith.constant dense<0.000000e+00> : vector<8x256xf32>
    %61 = tpu.matmul %59, %60, %cst_27 {dimension_numbers = #tpu.dot_dimension_numbers<[1], [0], [0], [1], [0, 0, 1, 1], [], []>} : vector<8x8xbf16>, vector<8x256xbf16>, vector<8x256xf32> -> vector<8x256xf32>
    %c0_28 = arith.constant 0 : index
    %c0_29 = arith.constant 0 : index
    %c0_30 = arith.constant 0 : index
    %62 = vector.load %arg7[%c0_28, %c0_29, %c0_30] : memref<4x8x1xf32, #tpu.memory_space<vmem>>, vector<1x8x1xf32>
    %63 = vector.shape_cast %62 : vector<1x8x1xf32> to vector<8x1xf32>
    %64 = vector.broadcast %63 : vector<8x1xf32> to vector<8x256xf32>
    %65 = arith.addf %61, %64 : vector<8x256xf32>
    %66 = arith.addf %65, %28 : vector<8x256xf32>
    %c2_i32 = arith.constant 2 : i32
    %67 = vector.broadcast %c2_i32 : i32 to vector<8x256xi32>
    %68 = arith.cmpi sge, %17, %67 : vector<8x256xi32>
    %c2_i32_31 = arith.constant 2 : i32
    %69 = tpu.dynamic_rotate %66 by %c2_i32_31 dim 1 : vector<8x256xf32>, i32 -> vector<8x256xf32>
    %cst_32 = arith.constant 0.000000e+00 : f32
    %70 = vector.broadcast %cst_32 : f32 to vector<8x256xf32>
    %71 = arith.select %68, %69, %70 : vector<8x256xi1>, vector<8x256xf32>
    %c14_i32 = arith.constant 14 : i32
    %72 = vector.broadcast %c14_i32 : i32 to vector<8x256xi32>
    %73 = arith.cmpi slt, %17, %72 : vector<8x256xi32>
    %c254_i32 = arith.constant 254 : i32
    %74 = tpu.dynamic_rotate %66 by %c254_i32 dim 1 : vector<8x256xf32>, i32 -> vector<8x256xf32>
    %cst_33 = arith.constant 0.000000e+00 : f32
    %75 = vector.broadcast %cst_33 : f32 to vector<8x256xf32>
    %76 = arith.select %73, %74, %75 : vector<8x256xi1>, vector<8x256xf32>
    %77 = tpu.concatenate %71, %66, %76 in 0 : vector<8x256xf32>, vector<8x256xf32>, vector<8x256xf32> -> vector<24x256xf32>
    %78 = arith.truncf %77 : vector<24x256xf32> to vector<24x256xbf16>
    %c1 = arith.constant 1 : index
    %c0_34 = arith.constant 0 : index
    %c0_35 = arith.constant 0 : index
    %79 = vector.load %arg4[%c1, %c0_34, %c0_35] : memref<4x16x24xbf16, #tpu.memory_space<vmem>>, vector<1x16x24xbf16>
    %80 = vector.shape_cast %79 : vector<1x16x24xbf16> to vector<16x24xbf16>
    %cst_36 = arith.constant dense<0.000000e+00> : vector<16x256xf32>
    %81 = tpu.matmul %80, %78, %cst_36 {dimension_numbers = #tpu.dot_dimension_numbers<[1], [0], [0], [1], [0, 0, 1, 1], [], []>} : vector<16x24xbf16>, vector<24x256xbf16>, vector<16x256xf32> -> vector<16x256xf32>
    %c1_37 = arith.constant 1 : index
    %c0_38 = arith.constant 0 : index
    %c0_39 = arith.constant 0 : index
    %82 = vector.load %arg5[%c1_37, %c0_38, %c0_39] : memref<4x16x1xf32, #tpu.memory_space<vmem>>, vector<1x16x1xf32>
    %83 = vector.shape_cast %82 : vector<1x16x1xf32> to vector<16x1xf32>
    %84 = vector.broadcast %83 : vector<16x1xf32> to vector<16x256xf32>
    %85 = arith.addf %81, %84 : vector<16x256xf32>
    %86 = vector.extract_strided_slice %85 {offsets = [0, 0], sizes = [8, 256], strides = [1, 1]} : vector<16x256xf32> to vector<8x256xf32>
    %87 = math.tanh %86 : vector<8x256xf32>
    %88 = vector.extract_strided_slice %85 {offsets = [8, 0], sizes = [8, 256], strides = [1, 1]} : vector<16x256xf32> to vector<8x256xf32>
    %89 = arith.negf %88 : vector<8x256xf32>
    %90 = math.exp %89 : vector<8x256xf32>
    %cst_40 = arith.constant 1.000000e+00 : f32
    %91 = vector.broadcast %cst_40 : f32 to vector<8x256xf32>
    %92 = arith.addf %91, %90 : vector<8x256xf32>
    %93 = arith.divf %91, %92 : vector<8x256xf32>
    %94 = arith.mulf %87, %93 : vector<8x256xf32>
    %c8 = arith.constant 8 : index
    %c0_41 = arith.constant 0 : index
    %95 = vector.load %arg15[%c8, %c0_41] : memref<32x256xf32, #tpu.memory_space<vmem>>, vector<8x256xf32>
    tpu.vector_store %arg15[%c8, %c0_41], %94 {strides = array<i32>} : memref<32x256xf32, #tpu.memory_space<vmem>>, vector<8x256xf32>,
    %c1_42 = arith.constant 1 : index
    %c0_43 = arith.constant 0 : index
    %c0_44 = arith.constant 0 : index
    %96 = vector.load %arg6[%c1_42, %c0_43, %c0_44] : memref<4x8x8xbf16, #tpu.memory_space<vmem>>, vector<1x8x8xbf16>
    %97 = vector.shape_cast %96 : vector<1x8x8xbf16> to vector<8x8xbf16>
    %98 = arith.truncf %94 : vector<8x256xf32> to vector<8x256xbf16>
    %cst_45 = arith.constant dense<0.000000e+00> : vector<8x256xf32>
    %99 = tpu.matmul %97, %98, %cst_45 {dimension_numbers = #tpu.dot_dimension_numbers<[1], [0], [0], [1], [0, 0, 1, 1], [], []>} : vector<8x8xbf16>, vector<8x256xbf16>, vector<8x256xf32> -> vector<8x256xf32>
    %c1_46 = arith.constant 1 : index
    %c0_47 = arith.constant 0 : index
    %c0_48 = arith.constant 0 : index
    %100 = vector.load %arg7[%c1_46, %c0_47, %c0_48] : memref<4x8x1xf32, #tpu.memory_space<vmem>>, vector<1x8x1xf32>
    %101 = vector.shape_cast %100 : vector<1x8x1xf32> to vector<8x1xf32>
    %102 = vector.broadcast %101 : vector<8x1xf32> to vector<8x256xf32>
    %103 = arith.addf %99, %102 : vector<8x256xf32>
    %104 = arith.addf %103, %66 : vector<8x256xf32>
    %c4_i32 = arith.constant 4 : i32
    %105 = vector.broadcast %c4_i32 : i32 to vector<8x256xi32>
    %106 = arith.cmpi sge, %17, %105 : vector<8x256xi32>
    %c4_i32_49 = arith.constant 4 : i32
    %107 = tpu.dynamic_rotate %104 by %c4_i32_49 dim 1 : vector<8x256xf32>, i32 -> vector<8x256xf32>
    %cst_50 = arith.constant 0.000000e+00 : f32
    %108 = vector.broadcast %cst_50 : f32 to vector<8x256xf32>
    %109 = arith.select %106, %107, %108 : vector<8x256xi1>, vector<8x256xf32>
    %c12_i32 = arith.constant 12 : i32
    %110 = vector.broadcast %c12_i32 : i32 to vector<8x256xi32>
    %111 = arith.cmpi slt, %17, %110 : vector<8x256xi32>
    %c252_i32 = arith.constant 252 : i32
    %112 = tpu.dynamic_rotate %104 by %c252_i32 dim 1 : vector<8x256xf32>, i32 -> vector<8x256xf32>
    %cst_51 = arith.constant 0.000000e+00 : f32
    %113 = vector.broadcast %cst_51 : f32 to vector<8x256xf32>
    %114 = arith.select %111, %112, %113 : vector<8x256xi1>, vector<8x256xf32>
    %115 = tpu.concatenate %109, %104, %114 in 0 : vector<8x256xf32>, vector<8x256xf32>, vector<8x256xf32> -> vector<24x256xf32>
    %116 = arith.truncf %115 : vector<24x256xf32> to vector<24x256xbf16>
    %c2 = arith.constant 2 : index
    %c0_52 = arith.constant 0 : index
    %c0_53 = arith.constant 0 : index
    %117 = vector.load %arg4[%c2, %c0_52, %c0_53] : memref<4x16x24xbf16, #tpu.memory_space<vmem>>, vector<1x16x24xbf16>
    %118 = vector.shape_cast %117 : vector<1x16x24xbf16> to vector<16x24xbf16>
    %cst_54 = arith.constant dense<0.000000e+00> : vector<16x256xf32>
    %119 = tpu.matmul %118, %116, %cst_54 {dimension_numbers = #tpu.dot_dimension_numbers<[1], [0], [0], [1], [0, 0, 1, 1], [], []>} : vector<16x24xbf16>, vector<24x256xbf16>, vector<16x256xf32> -> vector<16x256xf32>
    %c2_55 = arith.constant 2 : index
    %c0_56 = arith.constant 0 : index
    %c0_57 = arith.constant 0 : index
    %120 = vector.load %arg5[%c2_55, %c0_56, %c0_57] : memref<4x16x1xf32, #tpu.memory_space<vmem>>, vector<1x16x1xf32>
    %121 = vector.shape_cast %120 : vector<1x16x1xf32> to vector<16x1xf32>
    %122 = vector.broadcast %121 : vector<16x1xf32> to vector<16x256xf32>
    %123 = arith.addf %119, %122 : vector<16x256xf32>
    %124 = vector.extract_strided_slice %123 {offsets = [0, 0], sizes = [8, 256], strides = [1, 1]} : vector<16x256xf32> to vector<8x256xf32>
    %125 = math.tanh %124 : vector<8x256xf32>
    %126 = vector.extract_strided_slice %123 {offsets = [8, 0], sizes = [8, 256], strides = [1, 1]} : vector<16x256xf32> to vector<8x256xf32>
    %127 = arith.negf %126 : vector<8x256xf32>
    %128 = math.exp %127 : vector<8x256xf32>
    %cst_58 = arith.constant 1.000000e+00 : f32
    %129 = vector.broadcast %cst_58 : f32 to vector<8x256xf32>
    %130 = arith.addf %129, %128 : vector<8x256xf32>
    %131 = arith.divf %129, %130 : vector<8x256xf32>
    %132 = arith.mulf %125, %131 : vector<8x256xf32>
    %c16 = arith.constant 16 : index
    %c0_59 = arith.constant 0 : index
    %133 = vector.load %arg15[%c16, %c0_59] : memref<32x256xf32, #tpu.memory_space<vmem>>, vector<8x256xf32>
    tpu.vector_store %arg15[%c16, %c0_59], %132 {strides = array<i32>} : memref<32x256xf32, #tpu.memory_space<vmem>>, vector<8x256xf32>,
    %c2_60 = arith.constant 2 : index
    %c0_61 = arith.constant 0 : index
    %c0_62 = arith.constant 0 : index
    %134 = vector.load %arg6[%c2_60, %c0_61, %c0_62] : memref<4x8x8xbf16, #tpu.memory_space<vmem>>, vector<1x8x8xbf16>
    %135 = vector.shape_cast %134 : vector<1x8x8xbf16> to vector<8x8xbf16>
    %136 = arith.truncf %132 : vector<8x256xf32> to vector<8x256xbf16>
    %cst_63 = arith.constant dense<0.000000e+00> : vector<8x256xf32>
    %137 = tpu.matmul %135, %136, %cst_63 {dimension_numbers = #tpu.dot_dimension_numbers<[1], [0], [0], [1], [0, 0, 1, 1], [], []>} : vector<8x8xbf16>, vector<8x256xbf16>, vector<8x256xf32> -> vector<8x256xf32>
    %c2_64 = arith.constant 2 : index
    %c0_65 = arith.constant 0 : index
    %c0_66 = arith.constant 0 : index
    %138 = vector.load %arg7[%c2_64, %c0_65, %c0_66] : memref<4x8x1xf32, #tpu.memory_space<vmem>>, vector<1x8x1xf32>
    %139 = vector.shape_cast %138 : vector<1x8x1xf32> to vector<8x1xf32>
    %140 = vector.broadcast %139 : vector<8x1xf32> to vector<8x256xf32>
    %141 = arith.addf %137, %140 : vector<8x256xf32>
    %142 = arith.addf %141, %104 : vector<8x256xf32>
    %c8_i32 = arith.constant 8 : i32
    %143 = vector.broadcast %c8_i32 : i32 to vector<8x256xi32>
    %144 = arith.cmpi sge, %17, %143 : vector<8x256xi32>
    %c8_i32_67 = arith.constant 8 : i32
    %145 = tpu.dynamic_rotate %142 by %c8_i32_67 dim 1 : vector<8x256xf32>, i32 -> vector<8x256xf32>
    %cst_68 = arith.constant 0.000000e+00 : f32
    %146 = vector.broadcast %cst_68 : f32 to vector<8x256xf32>
    %147 = arith.select %144, %145, %146 : vector<8x256xi1>, vector<8x256xf32>
    %c8_i32_69 = arith.constant 8 : i32
    %148 = vector.broadcast %c8_i32_69 : i32 to vector<8x256xi32>
    %149 = arith.cmpi slt, %17, %148 : vector<8x256xi32>
    %c248_i32 = arith.constant 248 : i32
    %150 = tpu.dynamic_rotate %142 by %c248_i32 dim 1 : vector<8x256xf32>, i32 -> vector<8x256xf32>
    %cst_70 = arith.constant 0.000000e+00 : f32
    %151 = vector.broadcast %cst_70 : f32 to vector<8x256xf32>
    %152 = arith.select %149, %150, %151 : vector<8x256xi1>, vector<8x256xf32>
    %153 = tpu.concatenate %147, %142, %152 in 0 : vector<8x256xf32>, vector<8x256xf32>, vector<8x256xf32> -> vector<24x256xf32>
    %154 = arith.truncf %153 : vector<24x256xf32> to vector<24x256xbf16>
    %c3 = arith.constant 3 : index
    %c0_71 = arith.constant 0 : index
    %c0_72 = arith.constant 0 : index
    %155 = vector.load %arg4[%c3, %c0_71, %c0_72] : memref<4x16x24xbf16, #tpu.memory_space<vmem>>, vector<1x16x24xbf16>
    %156 = vector.shape_cast %155 : vector<1x16x24xbf16> to vector<16x24xbf16>
    %cst_73 = arith.constant dense<0.000000e+00> : vector<16x256xf32>
    %157 = tpu.matmul %156, %154, %cst_73 {dimension_numbers = #tpu.dot_dimension_numbers<[1], [0], [0], [1], [0, 0, 1, 1], [], []>} : vector<16x24xbf16>, vector<24x256xbf16>, vector<16x256xf32> -> vector<16x256xf32>
    %c3_74 = arith.constant 3 : index
    %c0_75 = arith.constant 0 : index
    %c0_76 = arith.constant 0 : index
    %158 = vector.load %arg5[%c3_74, %c0_75, %c0_76] : memref<4x16x1xf32, #tpu.memory_space<vmem>>, vector<1x16x1xf32>
    %159 = vector.shape_cast %158 : vector<1x16x1xf32> to vector<16x1xf32>
    %160 = vector.broadcast %159 : vector<16x1xf32> to vector<16x256xf32>
    %161 = arith.addf %157, %160 : vector<16x256xf32>
    %162 = vector.extract_strided_slice %161 {offsets = [0, 0], sizes = [8, 256], strides = [1, 1]} : vector<16x256xf32> to vector<8x256xf32>
    %163 = math.tanh %162 : vector<8x256xf32>
    %164 = vector.extract_strided_slice %161 {offsets = [8, 0], sizes = [8, 256], strides = [1, 1]} : vector<16x256xf32> to vector<8x256xf32>
    %165 = arith.negf %164 : vector<8x256xf32>
    %166 = math.exp %165 : vector<8x256xf32>
    %cst_77 = arith.constant 1.000000e+00 : f32
    %167 = vector.broadcast %cst_77 : f32 to vector<8x256xf32>
    %168 = arith.addf %167, %166 : vector<8x256xf32>
    %169 = arith.divf %167, %168 : vector<8x256xf32>
    %170 = arith.mulf %163, %169 : vector<8x256xf32>
    %c24 = arith.constant 24 : index
    %c0_78 = arith.constant 0 : index
    %171 = vector.load %arg15[%c24, %c0_78] : memref<32x256xf32, #tpu.memory_space<vmem>>, vector<8x256xf32>
    tpu.vector_store %arg15[%c24, %c0_78], %170 {strides = array<i32>} : memref<32x256xf32, #tpu.memory_space<vmem>>, vector<8x256xf32>,
    %c0_79 = arith.constant 0 : index
    %c0_80 = arith.constant 0 : index
    %172 = vector.load %arg8[%c0_79, %c0_80] : memref<16x32xbf16, #tpu.memory_space<vmem>>, vector<16x32xbf16>
    %c0_81 = arith.constant 0 : index
    %c0_82 = arith.constant 0 : index
    %173 = vector.load %arg15[%c0_81, %c0_82] : memref<32x256xf32, #tpu.memory_space<vmem>>, vector<32x256xf32>
    %174 = arith.truncf %173 : vector<32x256xf32> to vector<32x256xbf16>
    %cst_83 = arith.constant dense<0.000000e+00> : vector<16x256xf32>
    %175 = tpu.matmul %172, %174, %cst_83 {dimension_numbers = #tpu.dot_dimension_numbers<[1], [0], [0], [1], [0, 0, 1, 1], [], []>} : vector<16x32xbf16>, vector<32x256xbf16>, vector<16x256xf32> -> vector<16x256xf32>
    %c0_84 = arith.constant 0 : index
    %c0_85 = arith.constant 0 : index
    %176 = vector.load %arg9[%c0_84, %c0_85] : memref<16x1xf32, #tpu.memory_space<vmem>>, vector<16x1xf32>
    %177 = vector.broadcast %176 : vector<16x1xf32> to vector<16x256xf32>
    %178 = arith.addf %175, %177 : vector<16x256xf32>
    %cst_86 = arith.constant 0.000000e+00 : f32
    %179 = vector.broadcast %cst_86 : f32 to vector<16x256xf32>
    %180 = arith.maximumf %178, %179 : vector<16x256xf32>
    %c0_87 = arith.constant 0 : index
    %c0_88 = arith.constant 0 : index
    %181 = vector.load %arg10[%c0_87, %c0_88] : memref<8x16xbf16, #tpu.memory_space<vmem>>, vector<8x16xbf16>
    %182 = arith.truncf %180 : vector<16x256xf32> to vector<16x256xbf16>
    %cst_89 = arith.constant dense<0.000000e+00> : vector<8x256xf32>
    %183 = tpu.matmul %181, %182, %cst_89 {dimension_numbers = #tpu.dot_dimension_numbers<[1], [0], [0], [1], [0, 0, 1, 1], [], []>} : vector<8x16xbf16>, vector<16x256xbf16>, vector<8x256xf32> -> vector<8x256xf32>
    %c0_90 = arith.constant 0 : index
    %c0_91 = arith.constant 0 : index
    %184 = vector.load %arg11[%c0_90, %c0_91] : memref<8x1xf32, #tpu.memory_space<vmem>>, vector<8x1xf32>
    %185 = vector.broadcast %184 : vector<8x1xf32> to vector<8x256xf32>
    %186 = arith.addf %183, %185 : vector<8x256xf32>
    %cst_92 = arith.constant 0.000000e+00 : f32
    %187 = vector.broadcast %cst_92 : f32 to vector<8x256xf32>
    %188 = arith.maximumf %186, %187 : vector<8x256xf32>
    %c0_93 = arith.constant 0 : index
    %c0_94 = arith.constant 0 : index
    %189 = vector.load %arg12[%c0_93, %c0_94] : memref<16x8xbf16, #tpu.memory_space<vmem>>, vector<16x8xbf16>
    %190 = arith.truncf %188 : vector<8x256xf32> to vector<8x256xbf16>
    %cst_95 = arith.constant dense<0.000000e+00> : vector<16x256xf32>
    %191 = tpu.matmul %189, %190, %cst_95 {dimension_numbers = #tpu.dot_dimension_numbers<[1], [0], [0], [1], [0, 0, 1, 1], [], []>} : vector<16x8xbf16>, vector<8x256xbf16>, vector<16x256xf32> -> vector<16x256xf32>
    %c0_96 = arith.constant 0 : index
    %c0_97 = arith.constant 0 : index
    %192 = vector.load %arg13[%c0_96, %c0_97] : memref<16x1xf32, #tpu.memory_space<vmem>>, vector<16x1xf32>
    %193 = vector.broadcast %192 : vector<16x1xf32> to vector<16x256xf32>
    %194 = arith.addf %191, %193 : vector<16x256xf32>
    %c0_98 = arith.constant 0 : index
    %c0_99 = arith.constant 0 : index
    %195 = vector.load %arg14[%c0_98, %c0_99] : memref<16x256xf32, #tpu.memory_space<vmem>>, vector<16x256xf32>
    tpu.vector_store %arg14[%c0_98, %c0_99], %194 {strides = array<i32>} : memref<16x256xf32, #tpu.memory_space<vmem>>, vector<16x256xf32>,
    return
  }
  func.func @transform_0(%arg0: i32) -> (i32, i32) {
    %c0_i32 = arith.constant 0 : i32
    %c0_i32_0 = arith.constant 0 : i32
    return %c0_i32, %arg0 : i32, i32
  }
  func.func @transform_1(%arg0: i32) -> (i32, i32) {
    %c0_i32 = arith.constant 0 : i32
    %c0_i32_0 = arith.constant 0 : i32
    %c0_i32_1 = arith.constant 0 : i32
    return %c0_i32, %c0_i32_0 : i32, i32
  }
  func.func @transform_2(%arg0: i32) -> (i32, i32) {
    %c0_i32 = arith.constant 0 : i32
    %c0_i32_0 = arith.constant 0 : i32
    %c0_i32_1 = arith.constant 0 : i32
    return %c0_i32, %c0_i32_0 : i32, i32
  }
  func.func @transform_3(%arg0: i32) -> (i32, i32, i32) {
    %c0_i32 = arith.constant 0 : i32
    %c0_i32_0 = arith.constant 0 : i32
    %c0_i32_1 = arith.constant 0 : i32
    %c0_i32_2 = arith.constant 0 : i32
    return %c0_i32, %c0_i32_0, %c0_i32_1 : i32, i32, i32
  }
  func.func @transform_4(%arg0: i32) -> (i32, i32, i32) {
    %c0_i32 = arith.constant 0 : i32
    %c0_i32_0 = arith.constant 0 : i32
    %c0_i32_1 = arith.constant 0 : i32
    %c0_i32_2 = arith.constant 0 : i32
    return %c0_i32, %c0_i32_0, %c0_i32_1 : i32, i32, i32
  }
  func.func @transform_5(%arg0: i32) -> (i32, i32, i32) {
    %c0_i32 = arith.constant 0 : i32
    %c0_i32_0 = arith.constant 0 : i32
    %c0_i32_1 = arith.constant 0 : i32
    %c0_i32_2 = arith.constant 0 : i32
    return %c0_i32, %c0_i32_0, %c0_i32_1 : i32, i32, i32
  }
  func.func @transform_6(%arg0: i32) -> (i32, i32, i32) {
    %c0_i32 = arith.constant 0 : i32
    %c0_i32_0 = arith.constant 0 : i32
    %c0_i32_1 = arith.constant 0 : i32
    %c0_i32_2 = arith.constant 0 : i32
    return %c0_i32, %c0_i32_0, %c0_i32_1 : i32, i32, i32
  }
  func.func @transform_7(%arg0: i32) -> (i32, i32) {
    %c0_i32 = arith.constant 0 : i32
    %c0_i32_0 = arith.constant 0 : i32
    %c0_i32_1 = arith.constant 0 : i32
    return %c0_i32, %c0_i32_0 : i32, i32
  }
  func.func @transform_8(%arg0: i32) -> (i32, i32) {
    %c0_i32 = arith.constant 0 : i32
    %c0_i32_0 = arith.constant 0 : i32
    %c0_i32_1 = arith.constant 0 : i32
    return %c0_i32, %c0_i32_0 : i32, i32
  }
  func.func @transform_9(%arg0: i32) -> (i32, i32) {
    %c0_i32 = arith.constant 0 : i32
    %c0_i32_0 = arith.constant 0 : i32
    %c0_i32_1 = arith.constant 0 : i32
    return %c0_i32, %c0_i32_0 : i32, i32
  }
  func.func @transform_10(%arg0: i32) -> (i32, i32) {
    %c0_i32 = arith.constant 0 : i32
    %c0_i32_0 = arith.constant 0 : i32
    %c0_i32_1 = arith.constant 0 : i32
    return %c0_i32, %c0_i32_0 : i32, i32
  }
  func.func @transform_11(%arg0: i32) -> (i32, i32) {
    %c0_i32 = arith.constant 0 : i32
    %c0_i32_0 = arith.constant 0 : i32
    %c0_i32_1 = arith.constant 0 : i32
    return %c0_i32, %c0_i32_0 : i32, i32
  }
  func.func @transform_12(%arg0: i32) -> (i32, i32) {
    %c0_i32 = arith.constant 0 : i32
    %c0_i32_0 = arith.constant 0 : i32
    %c0_i32_1 = arith.constant 0 : i32
    return %c0_i32, %c0_i32_0 : i32, i32
  }
  func.func @transform_13(%arg0: i32) -> (i32, i32) {
    %c0_i32 = arith.constant 0 : i32
    %c0_i32_0 = arith.constant 0 : i32
    return %c0_i32, %arg0 : i32, i32
  }
}

</mosaic_0001>

<llo_original>
// kernel: tpu_custom_call.1
$region0: #{tpu_custom_call.1}
  #allocation0 [shape = 'u32[]', space=smem, size = 0x4, offset = 0x4, fixed_abs, tag = 'smem constant byte address 0x4 - core index']
  #allocation1 [shape = 'u32[144,128]{1,0:T(1,128)}', space=vmem, size = 0x12000, scoped, tag = 'internal scratch']
  #allocation2 [shape = 'f32[32,256]{1,0:T(8,128)}', space=vmem, size = 0x8000, scoped, tag = 'scratch operand']
  %s0 = inlined_call_operand.vmem [shape: bf16[16,256], index: 0, kind: input, shape index: {}]
  %s1 = inlined_call_operand.vmem [shape: bf16[8,16], index: 1, kind: input, shape index: {}]
  %s2 = inlined_call_operand.vmem [shape: f32[8,1], index: 2, kind: input, shape index: {}]
  %s3 = inlined_call_operand.vmem [shape: bf16[4,16,24], index: 3, kind: input, shape index: {}]
  %s4 = inlined_call_operand.vmem [shape: f32[4,16,1], index: 4, kind: input, shape index: {}]
  %s5 = inlined_call_operand.vmem [shape: bf16[4,8,8], index: 5, kind: input, shape index: {}]
  %s6 = inlined_call_operand.vmem [shape: f32[4,8,1], index: 6, kind: input, shape index: {}]
  %s7 = inlined_call_operand.vmem [shape: bf16[16,32], index: 7, kind: input, shape index: {}]
  %s8 = inlined_call_operand.vmem [shape: f32[16,1], index: 8, kind: input, shape index: {}]
  %s9 = inlined_call_operand.vmem [shape: bf16[8,16], index: 9, kind: input, shape index: {}]
  %s10 = inlined_call_operand.vmem [shape: f32[8,1], index: 10, kind: input, shape index: {}]
  %s11 = inlined_call_operand.vmem [shape: bf16[16,8], index: 11, kind: input, shape index: {}]
  %s12 = inlined_call_operand.vmem [shape: f32[16,1], index: 12, kind: input, shape index: {}]
  %s13 = inlined_call_operand.hbm [shape: f32[16,256], index: 13, kind: output, shape index: {}]
  %s14 = sld [smem:[#allocation0]]
  $region62: #{tpu_custom_call.1} parent=0
    _
  %s16 = ssub.s32 1, %s14
  %s17 = scalar_select 0, %s16, %s14
  $region1: #{tpu_custom_call.1} parent=0
    #allocation3 [shape = 'u8[16384]{0}', space=vmem, size = 0x4000, scoped, tag = 'output window, operand 0, single buffered']
    #allocation4 [shape = 's32[1]{0}', space=sflag, size = 0x4, scoped, tag = 'scoped memory for tpu_custom_call.1']
    %18 = vsyncpa [#allocation4], 0
    // Predicated region
    $region2: #{tpu_custom_call.1} parent=1 // pred_check
      _
    $region3: #{tpu_custom_call.1} parent=1 // pred_check_branch
      %20 = sbr.rel (0) target = $region5
    $region4: #{tpu_custom_call.1} parent=1 // pred_region
      _
    $region5: #{tpu_custom_call.1} parent=1 // pred_fallthru
      _
    // Predicated region
    $region6: #{tpu_custom_call.1} parent=1 // pred_check
      _
    $region7: #{tpu_custom_call.1} parent=1 // pred_check_branch
      %22 = sbr.rel (0) target = $region9
    $region8: #{tpu_custom_call.1} parent=1 // pred_region
      _
    $region9: #{tpu_custom_call.1} parent=1 // pred_fallthru
      _
    // Predicated region
    $region10: #{tpu_custom_call.1} parent=1 // pred_check
      _
    $region11: #{tpu_custom_call.1} parent=1 // pred_check_branch
      %24 = sbr.rel (0) target = $region13
    $region12: #{tpu_custom_call.1} parent=1 // pred_region
      _
    $region13: #{tpu_custom_call.1} parent=1 // pred_fallthru
      _
    // Predicated region
    $region14: #{tpu_custom_call.1} parent=1 // pred_check
      _
    $region15: #{tpu_custom_call.1} parent=1 // pred_check_branch
      %26 = sbr.rel (0) target = $region17
    $region16: #{tpu_custom_call.1} parent=1 // pred_region
      _
    $region17: #{tpu_custom_call.1} parent=1 // pred_fallthru
      _
    // Predicated region
    $region18: #{tpu_custom_call.1} parent=1 // pred_check
      _
    $region19: #{tpu_custom_call.1} parent=1 // pred_check_branch
      %28 = sbr.rel (0) target = $region21
    $region20: #{tpu_custom_call.1} parent=1 // pred_region
      _
    $region21: #{tpu_custom_call.1} parent=1 // pred_fallthru
      _
    // Predicated region
    $region22: #{tpu_custom_call.1} parent=1 // pred_check
      _
    $region23: #{tpu_custom_call.1} parent=1 // pred_check_branch
      %30 = sbr.rel (0) target = $region25
    $region24: #{tpu_custom_call.1} parent=1 // pred_region
      _
    $region25: #{tpu_custom_call.1} parent=1 // pred_fallthru
      _
    // Predicated region
    $region26: #{tpu_custom_call.1} parent=1 // pred_check
      _
    $region27: #{tpu_custom_call.1} parent=1 // pred_check_branch
      %32 = sbr.rel (0) target = $region29
    $region28: #{tpu_custom_call.1} parent=1 // pred_region
      _
    $region29: #{tpu_custom_call.1} parent=1 // pred_fallthru
      _
    // Predicated region
    $region30: #{tpu_custom_call.1} parent=1 // pred_check
      _
    $region31: #{tpu_custom_call.1} parent=1 // pred_check_branch
      %34 = sbr.rel (0) target = $region33
    $region32: #{tpu_custom_call.1} parent=1 // pred_region
      _
    $region33: #{tpu_custom_call.1} parent=1 // pred_fallthru
      _
    // Predicated region
    $region34: #{tpu_custom_call.1} parent=1 // pred_check
      _
    $region35: #{tpu_custom_call.1} parent=1 // pred_check_branch
      %36 = sbr.rel (0) target = $region37
    $region36: #{tpu_custom_call.1} parent=1 // pred_region
      _
    $region37: #{tpu_custom_call.1} parent=1 // pred_fallthru
      _
    // Predicated region
    $region38: #{tpu_custom_call.1} parent=1 // pred_check
      _
    $region39: #{tpu_custom_call.1} parent=1 // pred_check_branch
      %38 = sbr.rel (0) target = $region41
    $region40: #{tpu_custom_call.1} parent=1 // pred_region
      _
    $region41: #{tpu_custom_call.1} parent=1 // pred_fallthru
      _
    // Predicated region
    $region42: #{tpu_custom_call.1} parent=1 // pred_check
      _
    $region43: #{tpu_custom_call.1} parent=1 // pred_check_branch
      %40 = sbr.rel (0) target = $region45
    $region44: #{tpu_custom_call.1} parent=1 // pred_region
      _
    $region45: #{tpu_custom_call.1} parent=1 // pred_fallthru
      _
    // Predicated region
    $region46: #{tpu_custom_call.1} parent=1 // pred_check
      _
    $region47: #{tpu_custom_call.1} parent=1 // pred_check_branch
      %42 = sbr.rel (0) target = $region49
    $region48: #{tpu_custom_call.1} parent=1 // pred_region
      _
    $region49: #{tpu_custom_call.1} parent=1 // pred_fallthru
      _
    // Predicated region
    $region50: #{tpu_custom_call.1} parent=1 // pred_check
      _
    $region51: #{tpu_custom_call.1} parent=1 // pred_check_branch
      %44 = sbr.rel (0) target = $region53
    $region52: #{tpu_custom_call.1} parent=1 // pred_region
      _
    $region53: #{tpu_custom_call.1} parent=1 // pred_fallthru
      _
    %v46 = vld [vmem:[%s0] sm:$0xff]
    %v47 = vld [vmem:[%s0 + $0x8] sm:$0xff]
    %v48 = vlaneseq
    %v49 = vand.u32 %v48, 127
    %v50 = vadd.s32 %v49, 128
    %vm51 = vcmp.lt.s32.totalorder %v49, 0
    %v52 = vsub.s32 0, %v49
    %v53 = vsel %vm51, %v52, %v49
    %v54 = vshrl.u32 %v53, 7
    %v55 = vand.u32 %v53, 127
    %v56 = vsub.s32 0, %v55
    %v57 = vsel %vm51, %v56, %v55
    %vm58 = vcmp.lt.s32.totalorder %v50, 0
    %v59 = vsub.s32 0, %v50
    %v60 = vsel %vm58, %v59, %v50
    %v61 = vshrl.u32 %v60, 7
    %v62 = vand.u32 %v60, 127
    %v63 = vsub.s32 0, %v62
    %v64 = vsel %vm58, %v63, %v62
    %vm65 = vcmp.ne.s32.totalorder %v57, 0
    %vm66 = vcmp.ne.s32.totalorder %v64, 0
    %vm67 = vcmp.lt.s32.totalorder %v57, 0
    %vm68 = vcmp.lt.s32.totalorder %v64, 0
    %vm69 = vmand %vm67, %vm65
    %vm70 = vmand %vm68, %vm66
    %v71 = vadd.s32 %v57, 128
    %v72 = vadd.s32 %v64, 128
    %v73 = vsel %vm69, %v71, %v57
    %v74 = vsel %vm70, %v72, %v64
    %v75 = vld [vmem:[%s1] sm:$0xf]
    %v76 = vld [vmem:[%s2] sm:$0xff]
    %78 = vset.pattern.permute.xlu0 0
    %79 = vperm.xlu0 %78, %v76
    %v80 = vpop.permute.xlu0 %79
    %v84 = vunpack.c.l.b16 %v46
    %v85 = vunpack.c.h.b16 %v46
    %v86 = vunpack.c.l.b16 %v47
    %v87 = vunpack.c.h.b16 %v47
    %v88 = vpack.c.b16 %v86, %v84
    %v89 = vpack.c.b16 %v87, %v85
    %vm92 = vcmask 130048
    %v94 = vsel %vm92, %v75, 0
    %96 = vmatprep.subr.bf16.mxu0 %v89
    %97 = vmatpush1.bf16.msra.mxu0 %v88
    %98 = vmatprep.subr.bf16.mxu0 0
    %99 = vmatpush1.bf16.msra.mxu0 0
    %100 = vmatprep.subr.bf16.mxu0 0
    %101 = vmatpush1.bf16.msra.mxu0 0
    %102 = vmatprep.subr.bf16.mxu0 0
    %103 = vmatpush1.bf16.msra.mxu0 0
    %104 = vmatprep.subr.bf16.mxu0 0
    %105 = vmatpush1.bf16.msra.mxu0 0
    %106 = vmatprep.subr.bf16.mxu0 0
    %107 = vmatpush1.bf16.msra.mxu0 0
    %108 = vmatprep.subr.bf16.mxu0 0
    %109 = vmatpush1.bf16.msra.mxu0 0
    %110 = vmatprep.subr.bf16.mxu0 0
    %111 = vmatpush1.bf16.msra.mxu0 0
    %112 = vmatprep.subr.bf16.mxu0 0
    %113 = vmatpush1.bf16.msra.mxu0 0
    %114 = vmatprep.subr.bf16.mxu0 0
    %115 = vmatpush1.bf16.msra.mxu0 0
    %116 = vmatprep.subr.bf16.mxu0 0
    %117 = vmatpush1.bf16.msra.mxu0 0
    %118 = vmatprep.subr.bf16.mxu0 0
    %119 = vmatpush1.bf16.msra.mxu0 0
    %120 = vmatprep.subr.bf16.mxu0 0
    %121 = vmatpush1.bf16.msra.mxu0 0
    %122 = vmatprep.subr.bf16.mxu0 0
    %123 = vmatpush1.bf16.msra.mxu0 0
    %124 = vmatprep.subr.bf16.mxu0 0
    %125 = vmatpush1.bf16.msra.mxu0 0
    %126 = vmatprep.subr.bf16.mxu0 0
    %127 = vmatpush1.bf16.msra.mxu0 0
    %128 = vmatprep.mubr.bf16.mxu0 0
    %129 = vmatmul.mubr.bf16.gmra.mrb[0].mxu0 %v94
    %v130 = vpop.f32.mrb[0].mxu0
    %v131 = vadd.f32 %v80, %v130
    %v132 = vpop.f32.mrb[0].mxu0
    %v133 = vadd.f32 %v80, %v132
    %v134 = vpop.f32.mrb[0].mxu0
    %v135 = vpop.f32.mrb[0].mxu0
    %136 = vdwg.mxu0
    %v137 = vmax.f32 %v131, 0.0
    %v138 = vmax.f32 %v133, 0.0
    %vm139 = vcmp.lt.s32.totalorder %v73, 16
    %vm140 = vcmp.lt.s32.totalorder %v74, 16
    %v141 = vsel %vm139, %v137, 0.0
    %v142 = vsel %vm140, %v138, 0.0
    %vm143 = vcmp.ge.s32.totalorder %v73, 1
    %vm144 = vcmp.ge.s32.totalorder %v74, 1
    %145 = vrot.lane.b32.xlu0 %v141, 1
    %v146 = vpop.permute.xlu0 %145
    %147 = vrot.lane.b32.xlu0 %v142, 1
    %v148 = vpop.permute.xlu0 %147
    %vm149 = vcmp.lt.s32.totalorder %v49, 1
    %v150 = vsel %vm149, %v146, %v148
    %v151 = vsel %vm149, %v148, %v146
    %v152 = vsel %vm143, %v151, 0.0
    %v153 = vsel %vm144, %v150, 0.0
    %vm154 = vcmp.lt.s32.totalorder %v73, 15
    %vm155 = vcmp.lt.s32.totalorder %v74, 15
    %156 = vrot.lane.b32.xlu0 %v141, 127
    %v157 = vpop.permute.xlu0 %156
    %158 = vrot.lane.b32.xlu0 %v142, 127
    %v159 = vpop.permute.xlu0 %158
    %vm160 = vcmp.lt.s32.totalorder %v49, 127
    %v161 = vsel %vm160, %v157, %v159
    %v162 = vsel %vm160, %v159, %v157
    %v163 = vsel %vm154, %v161, 0.0
    %v164 = vsel %vm155, %v162, 0.0
    %v165 = vpack.c.bf16 %v141, %v152
    %v166 = vpack.c.bf16 %v142, %v153
    %v167 = vpack.c.bf16 %v163, %v163
    %v168 = vpack.c.bf16 %v164, %v164
    %v169 = vld [vmem:[%s3] sm:$0xf]
    %v170 = vld [vmem:[%s3 + $0x4] sm:$0xf]
    %v171 = vld [vmem:[%s4] sm:$0xff]
    %v172 = vld [vmem:[%s4 + $0x8] sm:$0xff]
    %174 = vset.pattern.permute.xlu0 0
    %175 = vperm.xlu0 %174, %v171
    %v176 = vpop.permute.xlu0 %175
    %179 = vset.pattern.permute.xlu0 0
    %180 = vperm.xlu0 %179, %v172
    %v181 = vpop.permute.xlu0 %180
    %v185 = vunpack.c.l.b16 %v169
    %v186 = vunpack.c.l.b16 %v170
    %v187 = vpack.c.b16 %v186, %v185
    %vm188 = vcmask 195584
    %v190 = vsel %vm188, %v187, 0
    %vm192 = vcmask 1043456
    %v194 = vsel %vm192, %v167, 0
    %v197 = vsel %vm192, %v168, 0
    %199 = vmatprep.subr.bf16.mxu0 %v166
    %200 = vmatpush1.bf16.msra.mxu0 %v165
    %201 = vmatprep.subr.bf16.mxu0 %v197
    %202 = vmatpush1.bf16.msra.mxu0 %v194
    %203 = vmatprep.subr.bf16.mxu0 0
    %204 = vmatpush1.bf16.msra.mxu0 0
    %205 = vmatprep.subr.bf16.mxu0 0
    %206 = vmatpush1.bf16.msra.mxu0 0
    %207 = vmatprep.subr.bf16.mxu0 0
    %208 = vmatpush1.bf16.msra.mxu0 0
    %209 = vmatprep.subr.bf16.mxu0 0
    %210 = vmatpush1.bf16.msra.mxu0 0
    %211 = vmatprep.subr.bf16.mxu0 0
    %212 = vmatpush1.bf16.msra.mxu0 0
    %213 = vmatprep.subr.bf16.mxu0 0
    %214 = vmatpush1.bf16.msra.mxu0 0
    %215 = vmatprep.subr.bf16.mxu0 0
    %216 = vmatpush1.bf16.msra.mxu0 0
    %217 = vmatprep.subr.bf16.mxu0 0
    %218 = vmatpush1.bf16.msra.mxu0 0
    %219 = vmatprep.subr.bf16.mxu0 0
    %220 = vmatpush1.bf16.msra.mxu0 0
    %221 = vmatprep.subr.bf16.mxu0 0
    %222 = vmatpush1.bf16.msra.mxu0 0
    %223 = vmatprep.subr.bf16.mxu0 0
    %224 = vmatpush1.bf16.msra.mxu0 0
    %225 = vmatprep.subr.bf16.mxu0 0
    %226 = vmatpush1.bf16.msra.mxu0 0
    %227 = vmatprep.subr.bf16.mxu0 0
    %228 = vmatpush1.bf16.msra.mxu0 0
    %229 = vmatprep.subr.bf16.mxu0 0
    %230 = vmatpush1.bf16.msra.mxu0 0
    %231 = vmatprep.mubr.bf16.mxu0 0
    %232 = vmatmul.mubr.bf16.gmra.mrb[0].mxu0 %v190
    %v233 = vpop.f32.mrb[0].mxu0
    %v234 = vadd.f32 %v176, %v233
    %v235 = vpop.f32.mrb[0].mxu0
    %v236 = vadd.f32 %v176, %v235
    %v237 = vpop.f32.mrb[0].mxu0
    %v238 = vadd.f32 %v181, %v237
    %v239 = vpop.f32.mrb[0].mxu0
    %v240 = vadd.f32 %v181, %v239
    %241 = vdwg.mxu0
    %v242 = vtanh.pop %v234
    %v243 = vtanh.pop %v236
    %v244 = vxor.u32 %v238, 2147483648
    %v245 = vxor.u32 %v240, 2147483648
    %v246 = vmul.f32 %v244, 1.442695
    %v247 = vpow.pop %v246
    %v248 = vmul.f32 %v245, 1.442695
    %v249 = vpow.pop %v248
    %v250 = vadd.f32 %v247, 1.0
    %v251 = vadd.f32 %v249, 1.0
    %v252 = vrcp.pop %v250
    %v253 = vmul.f32 1.0, %v252
    %v254 = vrcp.pop %v251
    %v255 = vmul.f32 1.0, %v254
    %v256 = vmul.f32 %v242, %v253
    %v257 = vmul.f32 %v243, %v255
    %258 = vst [vmem:[#allocation2] sm:$0xff] %v256
    %259 = vst [vmem:[#allocation2 + $0x8] sm:$0xff] %v257
    %v260 = vld [vmem:[%s5] sm:$0xf]
    %v261 = vpack.c.bf16 %v256, %v256
    %v262 = vpack.c.bf16 %v257, %v257
    %v263 = vld [vmem:[%s6] sm:$0xff]
    %265 = vset.pattern.permute.xlu0 0
    %266 = vperm.xlu0 %265, %v263
    %v267 = vpop.permute.xlu0 %266
    %vm269 = vcmask 64512
    %v271 = vsel %vm269, %v260, 0
    %v274 = vsel %vm192, %v261, 0
    %v277 = vsel %vm192, %v262, 0
    %279 = vmatprep.subr.bf16.mxu0 %v277
    %280 = vmatpush1.bf16.msra.mxu0 %v274
    %281 = vmatprep.subr.bf16.mxu0 0
    %282 = vmatpush1.bf16.msra.mxu0 0
    %283 = vmatprep.subr.bf16.mxu0 0
    %284 = vmatpush1.bf16.msra.mxu0 0
    %285 = vmatprep.subr.bf16.mxu0 0
    %286 = vmatpush1.bf16.msra.mxu0 0
    %287 = vmatprep.subr.bf16.mxu0 0
    %288 = vmatpush1.bf16.msra.mxu0 0
    %289 = vmatprep.subr.bf16.mxu0 0
    %290 = vmatpush1.bf16.msra.mxu0 0
    %291 = vmatprep.subr.bf16.mxu0 0
    %292 = vmatpush1.bf16.msra.mxu0 0
    %293 = vmatprep.subr.bf16.mxu0 0
    %294 = vmatpush1.bf16.msra.mxu0 0
    %295 = vmatprep.subr.bf16.mxu0 0
    %296 = vmatpush1.bf16.msra.mxu0 0
    %297 = vmatprep.subr.bf16.mxu0 0
    %298 = vmatpush1.bf16.msra.mxu0 0
    %299 = vmatprep.subr.bf16.mxu0 0
    %300 = vmatpush1.bf16.msra.mxu0 0
    %301 = vmatprep.subr.bf16.mxu0 0
    %302 = vmatpush1.bf16.msra.mxu0 0
    %303 = vmatprep.subr.bf16.mxu0 0
    %304 = vmatpush1.bf16.msra.mxu0 0
    %305 = vmatprep.subr.bf16.mxu0 0
    %306 = vmatpush1.bf16.msra.mxu0 0
    %307 = vmatprep.subr.bf16.mxu0 0
    %308 = vmatpush1.bf16.msra.mxu0 0
    %309 = vmatprep.subr.bf16.mxu0 0
    %310 = vmatpush1.bf16.msra.mxu0 0
    %311 = vmatprep.mubr.bf16.mxu0 0
    %312 = vmatmul.mubr.bf16.gmra.mrb[0].mxu0 %v271
    %v313 = vpop.f32.mrb[0].mxu0
    %v314 = vadd.f32 %v267, %v313
    %v315 = vpop.f32.mrb[0].mxu0
    %v316 = vadd.f32 %v267, %v315
    %v317 = vpop.f32.mrb[0].mxu0
    %v318 = vpop.f32.mrb[0].mxu0
    %319 = vdwg.mxu0
    %v320 = vadd.f32 %v314, %v141
    %v321 = vadd.f32 %v316, %v142
    %vm322 = vcmp.ge.s32.totalorder %v73, 2
    %vm323 = vcmp.ge.s32.totalorder %v74, 2
    %324 = vrot.lane.b32.xlu0 %v320, 2
    %v325 = vpop.permute.xlu0 %324
    %326 = vrot.lane.b32.xlu0 %v321, 2
    %v327 = vpop.permute.xlu0 %326
    %vm328 = vcmp.lt.s32.totalorder %v49, 2
    %v329 = vsel %vm328, %v325, %v327
    %v330 = vsel %vm328, %v327, %v325
    %v331 = vsel %vm322, %v330, 0.0
    %v332 = vsel %vm323, %v329, 0.0
    %vm333 = vcmp.lt.s32.totalorder %v73, 14
    %vm334 = vcmp.lt.s32.totalorder %v74, 14
    %335 = vrot.lane.b32.xlu0 %v320, 126
    %v336 = vpop.permute.xlu0 %335
    %337 = vrot.lane.b32.xlu0 %v321, 126
    %v338 = vpop.permute.xlu0 %337
    %vm339 = vcmp.lt.s32.totalorder %v49, 126
    %v340 = vsel %vm339, %v336, %v338
    %v341 = vsel %vm339, %v338, %v336
    %v342 = vsel %vm333, %v340, 0.0
    %v343 = vsel %vm334, %v341, 0.0
    %v344 = vpack.c.bf16 %v320, %v331
    %v345 = vpack.c.bf16 %v321, %v332
    %v346 = vpack.c.bf16 %v342, %v342
    %v347 = vpack.c.bf16 %v343, %v343
    %s348 = scalar_lea.vmem %s3, 8
    %v349 = vld [vmem:[%s348] sm:$0xf]
    %v350 = vld [vmem:[%s348 + $0x4] sm:$0xf]
    %s351 = scalar_lea.vmem %s4, 16
    %v352 = vld [vmem:[%s351] sm:$0xff]
    %v353 = vld [vmem:[%s351 + $0x8] sm:$0xff]
    %355 = vset.pattern.permute.xlu0 0
    %356 = vperm.xlu0 %355, %v352
    %v357 = vpop.permute.xlu0 %356
    %360 = vset.pattern.permute.xlu0 0
    %361 = vperm.xlu0 %360, %v353
    %v362 = vpop.permute.xlu0 %361
    %v366 = vunpack.c.l.b16 %v349
    %v367 = vunpack.c.l.b16 %v350
    %v368 = vpack.c.b16 %v367, %v366
    %v370 = vsel %vm188, %v368, 0
    %v373 = vsel %vm192, %v346, 0
    %v376 = vsel %vm192, %v347, 0
    %378 = vmatprep.subr.bf16.mxu0 %v345
    %379 = vmatpush1.bf16.msra.mxu0 %v344
    %380 = vmatprep.subr.bf16.mxu0 %v376
    %381 = vmatpush1.bf16.msra.mxu0 %v373
    %382 = vmatprep.subr.bf16.mxu0 0
    %383 = vmatpush1.bf16.msra.mxu0 0
    %384 = vmatprep.subr.bf16.mxu0 0
    %385 = vmatpush1.bf16.msra.mxu0 0
    %386 = vmatprep.subr.bf16.mxu0 0
    %387 = vmatpush1.bf16.msra.mxu0 0
    %388 = vmatprep.subr.bf16.mxu0 0
    %389 = vmatpush1.bf16.msra.mxu0 0
    %390 = vmatprep.subr.bf16.mxu0 0
    %391 = vmatpush1.bf16.msra.mxu0 0
    %392 = vmatprep.subr.bf16.mxu0 0
    %393 = vmatpush1.bf16.msra.mxu0 0
    %394 = vmatprep.subr.bf16.mxu0 0
    %395 = vmatpush1.bf16.msra.mxu0 0
    %396 = vmatprep.subr.bf16.mxu0 0
    %397 = vmatpush1.bf16.msra.mxu0 0
    %398 = vmatprep.subr.bf16.mxu0 0
    %399 = vmatpush1.bf16.msra.mxu0 0
    %400 = vmatprep.subr.bf16.mxu0 0
    %401 = vmatpush1.bf16.msra.mxu0 0
    %402 = vmatprep.subr.bf16.mxu0 0
    %403 = vmatpush1.bf16.msra.mxu0 0
    %404 = vmatprep.subr.bf16.mxu0 0
    %405 = vmatpush1.bf16.msra.mxu0 0
    %406 = vmatprep.subr.bf16.mxu0 0
    %407 = vmatpush1.bf16.msra.mxu0 0
    %408 = vmatprep.subr.bf16.mxu0 0
    %409 = vmatpush1.bf16.msra.mxu0 0
    %410 = vmatprep.mubr.bf16.mxu0 0
    %411 = vmatmul.mubr.bf16.gmra.mrb[0].mxu0 %v370
    %v412 = vpop.f32.mrb[0].mxu0
    %v413 = vadd.f32 %v357, %v412
    %v414 = vpop.f32.mrb[0].mxu0
    %v415 = vadd.f32 %v357, %v414
    %v416 = vpop.f32.mrb[0].mxu0
    %v417 = vadd.f32 %v362, %v416
    %v418 = vpop.f32.mrb[0].mxu0
    %v419 = vadd.f32 %v362, %v418
    %420 = vdwg.mxu0
    %v421 = vtanh.pop %v413
    %v422 = vtanh.pop %v415
    %v423 = vxor.u32 %v417, 2147483648
    %v424 = vxor.u32 %v419, 2147483648
    %v425 = vmul.f32 %v423, 1.442695
    %v426 = vpow.pop %v425
    %v427 = vmul.f32 %v424, 1.442695
    %v428 = vpow.pop %v427
    %v429 = vadd.f32 %v426, 1.0
    %v430 = vadd.f32 %v428, 1.0
    %v431 = vrcp.pop %v429
    %v432 = vmul.f32 1.0, %v431
    %v433 = vrcp.pop %v430
    %v434 = vmul.f32 1.0, %v433
    %v435 = vmul.f32 %v421, %v432
    %v436 = vmul.f32 %v422, %v434
    %437 = vst [vmem:[#allocation2 + $0x10] sm:$0xff] %v435
    %438 = vst [vmem:[#allocation2 + $0x18] sm:$0xff] %v436
    %s439 = scalar_lea.vmem %s5, 4
    %v440 = vld [vmem:[%s439] sm:$0xf]
    %v441 = vpack.c.bf16 %v435, %v435
    %v442 = vpack.c.bf16 %v436, %v436
    %s443 = scalar_lea.vmem %s6, 8
    %v444 = vld [vmem:[%s443] sm:$0xff]
    %446 = vset.pattern.permute.xlu0 0
    %447 = vperm.xlu0 %446, %v444
    %v448 = vpop.permute.xlu0 %447
    %v451 = vsel %vm269, %v440, 0
    %v454 = vsel %vm192, %v441, 0
    %v457 = vsel %vm192, %v442, 0
    %459 = vmatprep.subr.bf16.mxu0 %v457
    %460 = vmatpush1.bf16.msra.mxu0 %v454
    %461 = vmatprep.subr.bf16.mxu0 0
    %462 = vmatpush1.bf16.msra.mxu0 0
    %463 = vmatprep.subr.bf16.mxu0 0
    %464 = vmatpush1.bf16.msra.mxu0 0
    %465 = vmatprep.subr.bf16.mxu0 0
    %466 = vmatpush1.bf16.msra.mxu0 0
    %467 = vmatprep.subr.bf16.mxu0 0
    %468 = vmatpush1.bf16.msra.mxu0 0
    %469 = vmatprep.subr.bf16.mxu0 0
    %470 = vmatpush1.bf16.msra.mxu0 0
    %471 = vmatprep.subr.bf16.mxu0 0
    %472 = vmatpush1.bf16.msra.mxu0 0
    %473 = vmatprep.subr.bf16.mxu0 0
    %474 = vmatpush1.bf16.msra.mxu0 0
    %475 = vmatprep.subr.bf16.mxu0 0
    %476 = vmatpush1.bf16.msra.mxu0 0
    %477 = vmatprep.subr.bf16.mxu0 0
    %478 = vmatpush1.bf16.msra.mxu0 0
    %479 = vmatprep.subr.bf16.mxu0 0
    %480 = vmatpush1.bf16.msra.mxu0 0
    %481 = vmatprep.subr.bf16.mxu0 0
    %482 = vmatpush1.bf16.msra.mxu0 0
    %483 = vmatprep.subr.bf16.mxu0 0
    %484 = vmatpush1.bf16.msra.mxu0 0
    %485 = vmatprep.subr.bf16.mxu0 0
    %486 = vmatpush1.bf16.msra.mxu0 0
    %487 = vmatprep.subr.bf16.mxu0 0
    %488 = vmatpush1.bf16.msra.mxu0 0
    %489 = vmatprep.subr.bf16.mxu0 0
    %490 = vmatpush1.bf16.msra.mxu0 0
    %491 = vmatprep.mubr.bf16.mxu0 0
    %492 = vmatmul.mubr.bf16.gmra.mrb[0].mxu0 %v451
    %v493 = vpop.f32.mrb[0].mxu0
    %v494 = vadd.f32 %v448, %v493
    %v495 = vpop.f32.mrb[0].mxu0
    %v496 = vadd.f32 %v448, %v495
    %v497 = vpop.f32.mrb[0].mxu0
    %v498 = vpop.f32.mrb[0].mxu0
    %499 = vdwg.mxu0
    %v500 = vadd.f32 %v494, %v320
    %v501 = vadd.f32 %v496, %v321
    %vm502 = vcmp.ge.s32.totalorder %v73, 4
    %vm503 = vcmp.ge.s32.totalorder %v74, 4
    %504 = vrot.lane.b32.xlu0 %v500, 4
    %v505 = vpop.permute.xlu0 %504
    %506 = vrot.lane.b32.xlu0 %v501, 4
    %v507 = vpop.permute.xlu0 %506
    %vm508 = vcmp.lt.s32.totalorder %v49, 4
    %v509 = vsel %vm508, %v505, %v507
    %v510 = vsel %vm508, %v507, %v505
    %v511 = vsel %vm502, %v510, 0.0
    %v512 = vsel %vm503, %v509, 0.0
    %vm513 = vcmp.lt.s32.totalorder %v73, 12
    %vm514 = vcmp.lt.s32.totalorder %v74, 12
    %515 = vrot.lane.b32.xlu0 %v500, 124
    %v516 = vpop.permute.xlu0 %515
    %517 = vrot.lane.b32.xlu0 %v501, 124
    %v518 = vpop.permute.xlu0 %517
    %vm519 = vcmp.lt.s32.totalorder %v49, 124
    %v520 = vsel %vm519, %v516, %v518
    %v521 = vsel %vm519, %v518, %v516
    %v522 = vsel %vm513, %v520, 0.0
    %v523 = vsel %vm514, %v521, 0.0
    %v524 = vpack.c.bf16 %v500, %v511
    %v525 = vpack.c.bf16 %v501, %v512
    %v526 = vpack.c.bf16 %v522, %v522
    %v527 = vpack.c.bf16 %v523, %v523
    %s528 = scalar_lea.vmem %s3, 16
    %v529 = vld [vmem:[%s528] sm:$0xf]
    %v530 = vld [vmem:[%s528 + $0x4] sm:$0xf]
    %s531 = scalar_lea.vmem %s4, 32
    %v532 = vld [vmem:[%s531] sm:$0xff]
    %v533 = vld [vmem:[%s531 + $0x8] sm:$0xff]
    %535 = vset.pattern.permute.xlu0 0
    %536 = vperm.xlu0 %535, %v532
    %v537 = vpop.permute.xlu0 %536
    %540 = vset.pattern.permute.xlu0 0
    %541 = vperm.xlu0 %540, %v533
    %v542 = vpop.permute.xlu0 %541
    %v546 = vunpack.c.l.b16 %v529
    %v547 = vunpack.c.l.b16 %v530
    %v548 = vpack.c.b16 %v547, %v546
    %v550 = vsel %vm188, %v548, 0
    %v553 = vsel %vm192, %v526, 0
    %v556 = vsel %vm192, %v527, 0
    %558 = vmatprep.subr.bf16.mxu0 %v525
    %559 = vmatpush1.bf16.msra.mxu0 %v524
    %560 = vmatprep.subr.bf16.mxu0 %v556
    %561 = vmatpush1.bf16.msra.mxu0 %v553
    %562 = vmatprep.subr.bf16.mxu0 0
    %563 = vmatpush1.bf16.msra.mxu0 0
    %564 = vmatprep.subr.bf16.mxu0 0
    %565 = vmatpush1.bf16.msra.mxu0 0
    %566 = vmatprep.subr.bf16.mxu0 0
    %567 = vmatpush1.bf16.msra.mxu0 0
    %568 = vmatprep.subr.bf16.mxu0 0
    %569 = vmatpush1.bf16.msra.mxu0 0
    %570 = vmatprep.subr.bf16.mxu0 0
    %571 = vmatpush1.bf16.msra.mxu0 0
    %572 = vmatprep.subr.bf16.mxu0 0
    %573 = vmatpush1.bf16.msra.mxu0 0
    %574 = vmatprep.subr.bf16.mxu0 0
    %575 = vmatpush1.bf16.msra.mxu0 0
    %576 = vmatprep.subr.bf16.mxu0 0
    %577 = vmatpush1.bf16.msra.mxu0 0
    %578 = vmatprep.subr.bf16.mxu0 0
    %579 = vmatpush1.bf16.msra.mxu0 0
    %580 = vmatprep.subr.bf16.mxu0 0
    %581 = vmatpush1.bf16.msra.mxu0 0
    %582 = vmatprep.subr.bf16.mxu0 0
    %583 = vmatpush1.bf16.msra.mxu0 0
    %584 = vmatprep.subr.bf16.mxu0 0
    %585 = vmatpush1.bf16.msra.mxu0 0
    %586 = vmatprep.subr.bf16.mxu0 0
    %587 = vmatpush1.bf16.msra.mxu0 0
    %588 = vmatprep.subr.bf16.mxu0 0
    %589 = vmatpush1.bf16.msra.mxu0 0
    %590 = vmatprep.mubr.bf16.mxu0 0
    %591 = vmatmul.mubr.bf16.gmra.mrb[0].mxu0 %v550
    %v592 = vpop.f32.mrb[0].mxu0
    %v593 = vadd.f32 %v537, %v592
    %v594 = vpop.f32.mrb[0].mxu0
    %v595 = vadd.f32 %v537, %v594
    %v596 = vpop.f32.mrb[0].mxu0
    %v597 = vadd.f32 %v542, %v596
    %v598 = vpop.f32.mrb[0].mxu0
    %v599 = vadd.f32 %v542, %v598
    %600 = vdwg.mxu0
    %v601 = vtanh.pop %v593
    %v602 = vtanh.pop %v595
    %v603 = vxor.u32 %v597, 2147483648
    %v604 = vxor.u32 %v599, 2147483648
    %v605 = vmul.f32 %v603, 1.442695
    %v606 = vpow.pop %v605
    %v607 = vmul.f32 %v604, 1.442695
    %v608 = vpow.pop %v607
    %v609 = vadd.f32 %v606, 1.0
    %v610 = vadd.f32 %v608, 1.0
    %v611 = vrcp.pop %v609
    %v612 = vmul.f32 1.0, %v611
    %v613 = vrcp.pop %v610
    %v614 = vmul.f32 1.0, %v613
    %v615 = vmul.f32 %v601, %v612
    %v616 = vmul.f32 %v602, %v614
    %617 = vst [vmem:[#allocation2 + $0x20] sm:$0xff] %v615
    %618 = vst [vmem:[#allocation2 + $0x28] sm:$0xff] %v616
    %s619 = scalar_lea.vmem %s5, 8
    %v620 = vld [vmem:[%s619] sm:$0xf]
    %v621 = vpack.c.bf16 %v615, %v615
    %v622 = vpack.c.bf16 %v616, %v616
    %s623 = scalar_lea.vmem %s6, 16
    %v624 = vld [vmem:[%s623] sm:$0xff]
    %626 = vset.pattern.permute.xlu0 0
    %627 = vperm.xlu0 %626, %v624
    %v628 = vpop.permute.xlu0 %627
    %v631 = vsel %vm269, %v620, 0
    %v634 = vsel %vm192, %v621, 0
    %v637 = vsel %vm192, %v622, 0
    %639 = vmatprep.subr.bf16.mxu0 %v637
    %640 = vmatpush1.bf16.msra.mxu0 %v634
    %641 = vmatprep.subr.bf16.mxu0 0
    %642 = vmatpush1.bf16.msra.mxu0 0
    %643 = vmatprep.subr.bf16.mxu0 0
    %644 = vmatpush1.bf16.msra.mxu0 0
    %645 = vmatprep.subr.bf16.mxu0 0
    %646 = vmatpush1.bf16.msra.mxu0 0
    %647 = vmatprep.subr.bf16.mxu0 0
    %648 = vmatpush1.bf16.msra.mxu0 0
    %649 = vmatprep.subr.bf16.mxu0 0
    %650 = vmatpush1.bf16.msra.mxu0 0
    %651 = vmatprep.subr.bf16.mxu0 0
    %652 = vmatpush1.bf16.msra.mxu0 0
    %653 = vmatprep.subr.bf16.mxu0 0
    %654 = vmatpush1.bf16.msra.mxu0 0
    %655 = vmatprep.subr.bf16.mxu0 0
    %656 = vmatpush1.bf16.msra.mxu0 0
    %657 = vmatprep.subr.bf16.mxu0 0
    %658 = vmatpush1.bf16.msra.mxu0 0
    %659 = vmatprep.subr.bf16.mxu0 0
    %660 = vmatpush1.bf16.msra.mxu0 0
    %661 = vmatprep.subr.bf16.mxu0 0
    %662 = vmatpush1.bf16.msra.mxu0 0
    %663 = vmatprep.subr.bf16.mxu0 0
    %664 = vmatpush1.bf16.msra.mxu0 0
    %665 = vmatprep.subr.bf16.mxu0 0
    %666 = vmatpush1.bf16.msra.mxu0 0
    %667 = vmatprep.subr.bf16.mxu0 0
    %668 = vmatpush1.bf16.msra.mxu0 0
    %669 = vmatprep.subr.bf16.mxu0 0
    %670 = vmatpush1.bf16.msra.mxu0 0
    %671 = vmatprep.mubr.bf16.mxu0 0
    %672 = vmatmul.mubr.bf16.gmra.mrb[0].mxu0 %v631
    %v673 = vpop.f32.mrb[0].mxu0
    %v674 = vadd.f32 %v628, %v673
    %v675 = vpop.f32.mrb[0].mxu0
    %v676 = vadd.f32 %v628, %v675
    %v677 = vpop.f32.mrb[0].mxu0
    %v678 = vpop.f32.mrb[0].mxu0
    %679 = vdwg.mxu0
    %v680 = vadd.f32 %v674, %v500
    %v681 = vadd.f32 %v676, %v501
    %vm682 = vcmp.ge.s32.totalorder %v73, 8
    %vm683 = vcmp.ge.s32.totalorder %v74, 8
    %684 = vrot.lane.b32.xlu0 %v680, 8
    %v685 = vpop.permute.xlu0 %684
    %686 = vrot.lane.b32.xlu0 %v681, 8
    %v687 = vpop.permute.xlu0 %686
    %vm688 = vcmp.lt.s32.totalorder %v49, 8
    %v689 = vsel %vm688, %v685, %v687
    %v690 = vsel %vm688, %v687, %v685
    %v691 = vsel %vm682, %v690, 0.0
    %v692 = vsel %vm683, %v689, 0.0
    %vm693 = vcmp.lt.s32.totalorder %v73, 8
    %vm694 = vcmp.lt.s32.totalorder %v74, 8
    %695 = vrot.lane.b32.xlu0 %v680, 120
    %v696 = vpop.permute.xlu0 %695
    %697 = vrot.lane.b32.xlu0 %v681, 120
    %v698 = vpop.permute.xlu0 %697
    %vm699 = vcmp.lt.s32.totalorder %v49, 120
    %v700 = vsel %vm699, %v696, %v698
    %v701 = vsel %vm699, %v698, %v696
    %v702 = vsel %vm693, %v700, 0.0
    %v703 = vsel %vm694, %v701, 0.0
    %v704 = vpack.c.bf16 %v680, %v691
    %v705 = vpack.c.bf16 %v681, %v692
    %v706 = vpack.c.bf16 %v702, %v702
    %v707 = vpack.c.bf16 %v703, %v703
    %s708 = scalar_lea.vmem %s3, 24
    %v709 = vld [vmem:[%s708] sm:$0xf]
    %v710 = vld [vmem:[%s708 + $0x4] sm:$0xf]
    %s711 = scalar_lea.vmem %s4, 48
    %v712 = vld [vmem:[%s711] sm:$0xff]
    %v713 = vld [vmem:[%s711 + $0x8] sm:$0xff]
    %715 = vset.pattern.permute.xlu0 0
    %716 = vperm.xlu0 %715, %v712
    %v717 = vpop.permute.xlu0 %716
    %720 = vset.pattern.permute.xlu0 0
    %721 = vperm.xlu0 %720, %v713
    %v722 = vpop.permute.xlu0 %721
    %v726 = vunpack.c.l.b16 %v709
    %v727 = vunpack.c.l.b16 %v710
    %v728 = vpack.c.b16 %v727, %v726
    %v730 = vsel %vm188, %v728, 0
    %v733 = vsel %vm192, %v706, 0
    %v736 = vsel %vm192, %v707, 0
    %738 = vmatprep.subr.bf16.mxu0 %v705
    %739 = vmatpush1.bf16.msra.mxu0 %v704
    %740 = vmatprep.subr.bf16.mxu0 %v736
    %741 = vmatpush1.bf16.msra.mxu0 %v733
    %742 = vmatprep.subr.bf16.mxu0 0
    %743 = vmatpush1.bf16.msra.mxu0 0
    %744 = vmatprep.subr.bf16.mxu0 0
    %745 = vmatpush1.bf16.msra.mxu0 0
    %746 = vmatprep.subr.bf16.mxu0 0
    %747 = vmatpush1.bf16.msra.mxu0 0
    %748 = vmatprep.subr.bf16.mxu0 0
    %749 = vmatpush1.bf16.msra.mxu0 0
    %750 = vmatprep.subr.bf16.mxu0 0
    %751 = vmatpush1.bf16.msra.mxu0 0
    %752 = vmatprep.subr.bf16.mxu0 0
    %753 = vmatpush1.bf16.msra.mxu0 0
    %754 = vmatprep.subr.bf16.mxu0 0
    %755 = vmatpush1.bf16.msra.mxu0 0
    %756 = vmatprep.subr.bf16.mxu0 0
    %757 = vmatpush1.bf16.msra.mxu0 0
    %758 = vmatprep.subr.bf16.mxu0 0
    %759 = vmatpush1.bf16.msra.mxu0 0
    %760 = vmatprep.subr.bf16.mxu0 0
    %761 = vmatpush1.bf16.msra.mxu0 0
    %762 = vmatprep.subr.bf16.mxu0 0
    %763 = vmatpush1.bf16.msra.mxu0 0
    %764 = vmatprep.subr.bf16.mxu0 0
    %765 = vmatpush1.bf16.msra.mxu0 0
    %766 = vmatprep.subr.bf16.mxu0 0
    %767 = vmatpush1.bf16.msra.mxu0 0
    %768 = vmatprep.subr.bf16.mxu0 0
    %769 = vmatpush1.bf16.msra.mxu0 0
    %770 = vmatprep.mubr.bf16.mxu0 0
    %771 = vmatmul.mubr.bf16.gmra.mrb[0].mxu0 %v730
    %v772 = vpop.f32.mrb[0].mxu0
    %v773 = vadd.f32 %v717, %v772
    %v774 = vpop.f32.mrb[0].mxu0
    %v775 = vadd.f32 %v717, %v774
    %v776 = vpop.f32.mrb[0].mxu0
    %v777 = vadd.f32 %v722, %v776
    %v778 = vpop.f32.mrb[0].mxu0
    %v779 = vadd.f32 %v722, %v778
    %780 = vdwg.mxu0
    %v781 = vtanh.pop %v773
    %v782 = vtanh.pop %v775
    %v783 = vxor.u32 %v777, 2147483648
    %v784 = vxor.u32 %v779, 2147483648
    %v785 = vmul.f32 %v783, 1.442695
    %v786 = vpow.pop %v785
    %v787 = vmul.f32 %v784, 1.442695
    %v788 = vpow.pop %v787
    %v789 = vadd.f32 %v786, 1.0
    %v790 = vadd.f32 %v788, 1.0
    %v791 = vrcp.pop %v789
    %v792 = vmul.f32 1.0, %v791
    %v793 = vrcp.pop %v790
    %v794 = vmul.f32 1.0, %v793
    %v795 = vmul.f32 %v781, %v792
    %v796 = vmul.f32 %v782, %v794
    %797 = vst [vmem:[#allocation2 + $0x30] sm:$0xff] %v795
    %798 = vst [vmem:[#allocation2 + $0x38] sm:$0xff] %v796
    %v799 = vld [vmem:[%s7] sm:$0xf]
    %v800 = vld [vmem:[%s7 + $0x4] sm:$0xf]
    %v801 = vld [vmem:[#allocation2] sm:$0xff]
    %v802 = vld [vmem:[#allocation2 + $0x8] sm:$0xff]
    %v803 = vld [vmem:[#allocation2 + $0x10] sm:$0xff]
    %v804 = vld [vmem:[#allocation2 + $0x18] sm:$0xff]
    %v805 = vld [vmem:[#allocation2 + $0x20] sm:$0xff]
    %v806 = vld [vmem:[#allocation2 + $0x28] sm:$0xff]
    %v807 = vld [vmem:[#allocation2 + $0x30] sm:$0xff]
    %v808 = vld [vmem:[#allocation2 + $0x38] sm:$0xff]
    %v809 = vpack.c.bf16 %v803, %v801
    %v810 = vpack.c.bf16 %v804, %v802
    %v811 = vpack.c.bf16 %v807, %v805
    %v812 = vpack.c.bf16 %v808, %v806
    %v813 = vld [vmem:[%s8] sm:$0xff]
    %v814 = vld [vmem:[%s8 + $0x8] sm:$0xff]
    %816 = vset.pattern.permute.xlu0 0
    %817 = vperm.xlu0 %816, %v813
    %v818 = vpop.permute.xlu0 %817
    %821 = vset.pattern.permute.xlu0 0
    %822 = vperm.xlu0 %821, %v814
    %v823 = vpop.permute.xlu0 %822
    %v827 = vunpack.c.l.b16 %v799
    %v828 = vunpack.c.l.b16 %v800
    %v829 = vpack.c.b16 %v828, %v827
    %vm830 = vcmask 261120
    %v832 = vsel %vm830, %v829, 0
    %834 = vmatprep.subr.bf16.mxu0 %v810
    %835 = vmatpush1.bf16.msra.mxu0 %v809
    %836 = vmatprep.subr.bf16.mxu0 %v812
    %837 = vmatpush1.bf16.msra.mxu0 %v811
    %838 = vmatprep.subr.bf16.mxu0 0
    %839 = vmatpush1.bf16.msra.mxu0 0
    %840 = vmatprep.subr.bf16.mxu0 0
    %841 = vmatpush1.bf16.msra.mxu0 0
    %842 = vmatprep.subr.bf16.mxu0 0
    %843 = vmatpush1.bf16.msra.mxu0 0
    %844 = vmatprep.subr.bf16.mxu0 0
    %845 = vmatpush1.bf16.msra.mxu0 0
    %846 = vmatprep.subr.bf16.mxu0 0
    %847 = vmatpush1.bf16.msra.mxu0 0
    %848 = vmatprep.subr.bf16.mxu0 0
    %849 = vmatpush1.bf16.msra.mxu0 0
    %850 = vmatprep.subr.bf16.mxu0 0
    %851 = vmatpush1.bf16.msra.mxu0 0
    %852 = vmatprep.subr.bf16.mxu0 0
    %853 = vmatpush1.bf16.msra.mxu0 0
    %854 = vmatprep.subr.bf16.mxu0 0
    %855 = vmatpush1.bf16.msra.mxu0 0
    %856 = vmatprep.subr.bf16.mxu0 0
    %857 = vmatpush1.bf16.msra.mxu0 0
    %858 = vmatprep.subr.bf16.mxu0 0
    %859 = vmatpush1.bf16.msra.mxu0 0
    %860 = vmatprep.subr.bf16.mxu0 0
    %861 = vmatpush1.bf16.msra.mxu0 0
    %862 = vmatprep.subr.bf16.mxu0 0
    %863 = vmatpush1.bf16.msra.mxu0 0
    %864 = vmatprep.subr.bf16.mxu0 0
    %865 = vmatpush1.bf16.msra.mxu0 0
    %866 = vmatprep.mubr.bf16.mxu0 0
    %867 = vmatmul.mubr.bf16.gmra.mrb[0].mxu0 %v832
    %v868 = vpop.f32.mrb[0].mxu0
    %v869 = vadd.f32 %v818, %v868
    %v870 = vpop.f32.mrb[0].mxu0
    %v871 = vadd.f32 %v818, %v870
    %v872 = vpop.f32.mrb[0].mxu0
    %v873 = vadd.f32 %v823, %v872
    %v874 = vpop.f32.mrb[0].mxu0
    %v875 = vadd.f32 %v823, %v874
    %876 = vdwg.mxu0
    %v877 = vmax.f32 %v869, 0.0
    %v878 = vmax.f32 %v871, 0.0
    %v879 = vmax.f32 %v873, 0.0
    %v880 = vmax.f32 %v875, 0.0
    %v881 = vld [vmem:[%s9] sm:$0xf]
    %v882 = vpack.c.bf16 %v879, %v877
    %v883 = vpack.c.bf16 %v880, %v878
    %v884 = vld [vmem:[%s10] sm:$0xff]
    %886 = vset.pattern.permute.xlu0 0
    %887 = vperm.xlu0 %886, %v884
    %v888 = vpop.permute.xlu0 %887
    %v891 = vsel %vm92, %v881, 0
    %893 = vmatprep.subr.bf16.mxu0 %v883
    %894 = vmatpush1.bf16.msra.mxu0 %v882
    %895 = vmatprep.subr.bf16.mxu0 0
    %896 = vmatpush1.bf16.msra.mxu0 0
    %897 = vmatprep.subr.bf16.mxu0 0
    %898 = vmatpush1.bf16.msra.mxu0 0
    %899 = vmatprep.subr.bf16.mxu0 0
    %900 = vmatpush1.bf16.msra.mxu0 0
    %901 = vmatprep.subr.bf16.mxu0 0
    %902 = vmatpush1.bf16.msra.mxu0 0
    %903 = vmatprep.subr.bf16.mxu0 0
    %904 = vmatpush1.bf16.msra.mxu0 0
    %905 = vmatprep.subr.bf16.mxu0 0
    %906 = vmatpush1.bf16.msra.mxu0 0
    %907 = vmatprep.subr.bf16.mxu0 0
    %908 = vmatpush1.bf16.msra.mxu0 0
    %909 = vmatprep.subr.bf16.mxu0 0
    %910 = vmatpush1.bf16.msra.mxu0 0
    %911 = vmatprep.subr.bf16.mxu0 0
    %912 = vmatpush1.bf16.msra.mxu0 0
    %913 = vmatprep.subr.bf16.mxu0 0
    %914 = vmatpush1.bf16.msra.mxu0 0
    %915 = vmatprep.subr.bf16.mxu0 0
    %916 = vmatpush1.bf16.msra.mxu0 0
    %917 = vmatprep.subr.bf16.mxu0 0
    %918 = vmatpush1.bf16.msra.mxu0 0
    %919 = vmatprep.subr.bf16.mxu0 0
    %920 = vmatpush1.bf16.msra.mxu0 0
    %921 = vmatprep.subr.bf16.mxu0 0
    %922 = vmatpush1.bf16.msra.mxu0 0
    %923 = vmatprep.subr.bf16.mxu0 0
    %924 = vmatpush1.bf16.msra.mxu0 0
    %925 = vmatprep.mubr.bf16.mxu0 0
    %926 = vmatmul.mubr.bf16.gmra.mrb[0].mxu0 %v891
    %v927 = vpop.f32.mrb[0].mxu0
    %v928 = vadd.f32 %v888, %v927
    %v929 = vpop.f32.mrb[0].mxu0
    %v930 = vadd.f32 %v888, %v929
    %v931 = vpop.f32.mrb[0].mxu0
    %v932 = vpop.f32.mrb[0].mxu0
    %933 = vdwg.mxu0
    %v934 = vmax.f32 %v928, 0.0
    %v935 = vmax.f32 %v930, 0.0
    %v936 = vld [vmem:[%s11] sm:$0xf]
    %v937 = vld [vmem:[%s11 + $0x4] sm:$0xf]
    %v938 = vpack.c.bf16 %v934, %v934
    %v939 = vpack.c.bf16 %v935, %v935
    %v940 = vld [vmem:[%s12] sm:$0xff]
    %v941 = vld [vmem:[%s12 + $0x8] sm:$0xff]
    %943 = vset.pattern.permute.xlu0 0
    %944 = vperm.xlu0 %943, %v940
    %v945 = vpop.permute.xlu0 %944
    %948 = vset.pattern.permute.xlu0 0
    %949 = vperm.xlu0 %948, %v941
    %v950 = vpop.permute.xlu0 %949
    %v954 = vunpack.c.l.b16 %v936
    %v955 = vunpack.c.l.b16 %v937
    %v956 = vpack.c.b16 %v955, %v954
    %v958 = vsel %vm269, %v956, 0
    %v961 = vsel %vm192, %v938, 0
    %v964 = vsel %vm192, %v939, 0
    %966 = vmatprep.subr.bf16.mxu0 %v964
    %967 = vmatpush1.bf16.msra.mxu0 %v961
    %968 = vmatprep.subr.bf16.mxu0 0
    %969 = vmatpush1.bf16.msra.mxu0 0
    %970 = vmatprep.subr.bf16.mxu0 0
    %971 = vmatpush1.bf16.msra.mxu0 0
    %972 = vmatprep.subr.bf16.mxu0 0
    %973 = vmatpush1.bf16.msra.mxu0 0
    %974 = vmatprep.subr.bf16.mxu0 0
    %975 = vmatpush1.bf16.msra.mxu0 0
    %976 = vmatprep.subr.bf16.mxu0 0
    %977 = vmatpush1.bf16.msra.mxu0 0
    %978 = vmatprep.subr.bf16.mxu0 0
    %979 = vmatpush1.bf16.msra.mxu0 0
    %980 = vmatprep.subr.bf16.mxu0 0
    %981 = vmatpush1.bf16.msra.mxu0 0
    %982 = vmatprep.subr.bf16.mxu0 0
    %983 = vmatpush1.bf16.msra.mxu0 0
    %984 = vmatprep.subr.bf16.mxu0 0
    %985 = vmatpush1.bf16.msra.mxu0 0
    %986 = vmatprep.subr.bf16.mxu0 0
    %987 = vmatpush1.bf16.msra.mxu0 0
    %988 = vmatprep.subr.bf16.mxu0 0
    %989 = vmatpush1.bf16.msra.mxu0 0
    %990 = vmatprep.subr.bf16.mxu0 0
    %991 = vmatpush1.bf16.msra.mxu0 0
    %992 = vmatprep.subr.bf16.mxu0 0
    %993 = vmatpush1.bf16.msra.mxu0 0
    %994 = vmatprep.subr.bf16.mxu0 0
    %995 = vmatpush1.bf16.msra.mxu0 0
    %996 = vmatprep.subr.bf16.mxu0 0
    %997 = vmatpush1.bf16.msra.mxu0 0
    %998 = vmatprep.mubr.bf16.mxu0 0
    %999 = vmatmul.mubr.bf16.gmra.mrb[0].mxu0 %v958
    %v1000 = vpop.f32.mrb[0].mxu0
    %v1001 = vadd.f32 %v945, %v1000
    %v1002 = vpop.f32.mrb[0].mxu0
    %v1003 = vadd.f32 %v945, %v1002
    %v1004 = vpop.f32.mrb[0].mxu0
    %v1005 = vadd.f32 %v950, %v1004
    %v1006 = vpop.f32.mrb[0].mxu0
    %v1007 = vadd.f32 %v950, %v1006
    %1008 = vdwg.mxu0
    %1009 = vst [vmem:[#allocation3] sm:$0xff] %v1001
    %1010 = vst [vmem:[#allocation3 + $0x8] sm:$0xff] %v1003
    %1011 = vst [vmem:[#allocation3 + $0x10] sm:$0xff] %v1005
    %1012 = vst [vmem:[#allocation3 + $0x18] sm:$0xff] %v1007
    // Predicated region
    $region54: #{tpu_custom_call.1} parent=1 // pred_check
      _
    $region55: #{tpu_custom_call.1} parent=1 // pred_check_branch
      %1014 = sbr.rel (0) target = $region57
    $region56: #{tpu_custom_call.1} parent=1 // pred_region
      %s1016 = ssub.s32 512, 512
      %1017 = vsyncadd [#allocation4], %s1016
      %s1018 = sshll.u32 [#allocation3], 4
      %s1019 = int_to_ptr.vmem [resolvable:$true] %s1018
      %1024 = dma.vmem_to_hbm [thread:$0]  %s1019, 512, %s13, [#allocation4], 256, 256, 16
    $region57: #{tpu_custom_call.1} parent=1 // pred_fallthru
      _
    // Predicated region
    $region58: #{tpu_custom_call.1} parent=1 // pred_check
      _
    $region59: #{tpu_custom_call.1} parent=1 // pred_check_branch
      %1026 = sbr.rel (0) target = $region61
    $region60: #{tpu_custom_call.1} parent=1 // pred_region
      %1027 = dma.done [#allocation4], 512
    $region61: #{tpu_custom_call.1} parent=1 // pred_fallthru
      _
    %1028 = vsyncpa [#allocation4], 1

</llo_original>
